<compile_context>
chip_gen: v7x
topology: tpu7x:2x2x1
jax: 0.10.0
libtpu: 0.0.40
codegen_flags: <defaults>
</compile_context>

<pallas_src>
import functools

import jax
import jax.numpy as jnp
from jax import lax
from jax.experimental import pallas as pl
from jax.experimental.pallas import tpu as pltpu

EPS = 1e-5


def preact_block_kernel(x_ref, g1_ref, b1_ref, m1_ref, wsd_ref, w1_ref,
                        g2_ref, b2_ref, m2_ref, w2_ref,
                        out_ref, pad1_ref, pad2_ref, *, N, H, W, pad_top, mxu_dtype):
    NH = N * H

    def bn_relu(t, g_ref, b_ref, m_ref):
        # Training-mode BatchNorm2d + ReLU in the (N*H, W*C) lane-dense layout.
        # m_ref is a constant (W*C, W*C) matrix with entries 1/(N*H*W) wherever the two lane
        # indices map to the same channel: one tiny matmul both pools the per-lane sums over
        # the W positions and re-broadcasts the per-channel statistic back onto the lanes.
        s1 = jnp.sum(t, axis=0, keepdims=True)                                  # (1, W*C)
        mean = jnp.dot(s1, m_ref[...], preferred_element_type=jnp.float32)      # (1, W*C)
        d = t - mean
        s2 = jnp.sum(d * d, axis=0, keepdims=True)                              # centered
        var = jnp.dot(s2, m_ref[...], preferred_element_type=jnp.float32)       # biased var
        y = d * lax.rsqrt(var + EPS) * g_ref[...] + b_ref[...]
        return jnp.maximum(y, 0.0)

    def conv3x3(a_mxu, pad_ref, w_ref, acc0=None):
        # 3x3 / stride-1 / pad-1 conv: dx taps + W-boundary padding are already folded into
        # the block-tridiagonal weights w_ref[dy] (W*Cin, W*Cout); dy taps are offset row
        # slices of a zero-padded per-image scratch  =>  3 lane-dense MXU matmuls, no masks.
        lanes_in = a_mxu.shape[-1]
        # Only the two padding rows the taps read need zeroing (rows 0..pad_top-2 unused).
        zrow = jnp.zeros((N, 1, lanes_in), pad_ref.dtype)
        pad_ref[:, pad_top - 1:pad_top, :] = zrow
        pad_ref[:, pad_top + H:pad_top + H + 1, :] = zrow
        # Interior write: tile-aligned sublane offset => unmasked stores, already MXU dtype.
        pad_ref[:, pad_top:pad_top + H, :] = a_mxu.reshape(N, H, lanes_in)

        def tap(dy):
            r0 = pad_top + dy - 1
            return pad_ref[:, r0:r0 + H, :].reshape(NH, lanes_in)

        acc = jnp.dot(tap(0), w_ref[0], preferred_element_type=jnp.float32)
        if acc0 is not None:
            acc = acc + acc0                       # fuse residual add into the accumulator
        for dy in (1, 2):                          # static unroll, 3 row taps total
            acc = acc + jnp.dot(tap(dy), w_ref[dy], preferred_element_type=jnp.float32)
        return acc

    x = x_ref[...].astype(jnp.float32)
    a1 = bn_relu(x, g1_ref, b1_ref, m1_ref)                          # bn1 + relu1 (f32 VPU)
    a1m = a1.astype(mxu_dtype)                                       # single cast, reused
    shortcut = jnp.dot(a1m, wsd_ref[...],                            # 1x1 conv (block-diag)
                       preferred_element_type=jnp.float32)
    o1 = conv3x3(a1m, pad1_ref, w1_ref)                              # conv1
    a2 = bn_relu(o1, g2_ref, b2_ref, m2_ref)                         # bn2 + relu2 (f32 VPU)
    out = conv3x3(a2.astype(mxu_dtype), pad2_ref, w2_ref,
                  acc0=shortcut)                                     # conv2 + residual
    out_ref[...] = out.astype(out_ref.dtype)                         # lane-dense (NH, W*Cout)


def _band_conv_weights(w_oihw, W, mxu_dtype):
    """OIHW 3x3 conv weight -> (3, W*Cin, W*Cout) block-tridiagonal lane-space weights.

    Row dy maps the lane-dense tap a(h+dy-1) (lanes = w_in*Cin + ci) to the lane-dense
    output (lanes = w_out*Cout + co); the three dx taps and the zero padding along W are
    folded into the banded block structure (off-band blocks are zero == padding).
    """
    cout, cin = w_oihw.shape[0], w_oihw.shape[1]
    taps = jnp.transpose(w_oihw, (2, 3, 1, 0)).astype(jnp.float32)   # (3, 3, Cin, Cout)
    per_dy = []
    for dy in range(3):
        m = jnp.zeros((W * cin, W * cout), jnp.float32)
        for dx in range(3):
            band = jnp.eye(W, k=1 - dx, dtype=jnp.float32)  # input block w -> output block w+1-dx
            m = m + jnp.kron(band, taps[dy, dx])
        per_dy.append(m)
    return jnp.stack(per_dy).astype(mxu_dtype)


def _channel_pool_matrix(C, W, n_pixels):
    # (W*C, W*C) with entries 1/n_pixels where both lane indices belong to the same channel.
    return (jnp.kron(jnp.ones((W, W), jnp.float32), jnp.eye(C, dtype=jnp.float32))
            / float(n_pixels))


def preact_block_forward(x_nchw, params, mxu_dtype=jnp.bfloat16):
    """Pallas forward. x_nchw: (N, Cin, H, W) float32. Returns (N, Cout, H, W) float32."""
    g1, b1, w_sc, w1, g2, b2, w2 = params
    N, Cin, H, W = x_nchw.shape
    Cmid = w1.shape[0]
    Cout = w2.shape[0]
    NH = N * H

    # Interior rows of the conv pad-scratch start at a native-tile-aligned sublane offset
    # (8 rows for a 4-byte scratch, 16 for a 2-byte packed scratch) => unmasked stores.
    pad_top = 8 * (4 // jnp.dtype(mxu_dtype).itemsize)
    pad_depth = pad_top + H + 1

    # NCHW -> NHWC -> lane-dense (N*H, W*Cin)
    x2 = jnp.transpose(x_nchw, (0, 2, 3, 1)).reshape(NH, W * Cin).astype(jnp.float32)

    # Parameter repacking (tiny wrapper-side constants).
    g1l = jnp.tile(g1.astype(jnp.float32), W).reshape(1, W * Cin)
    b1l = jnp.tile(b1.astype(jnp.float32), W).reshape(1, W * Cin)
    g2l = jnp.tile(g2.astype(jnp.float32), W).reshape(1, W * Cmid)
    b2l = jnp.tile(b2.astype(jnp.float32), W).reshape(1, W * Cmid)
    m1 = _channel_pool_matrix(Cin, W, N * H * W)
    m2 = _channel_pool_matrix(Cmid, W, N * H * W)
    ws = jnp.transpose(w_sc[:, :, 0, 0], (1, 0)).astype(jnp.float32)       # (Cin, Cout)
    wsd = jnp.kron(jnp.eye(W, dtype=jnp.float32), ws).astype(mxu_dtype)    # (W*Cin, W*Cout)
    w1b = _band_conv_weights(w1, W, mxu_dtype)                             # (3, W*Cin, W*Cmid)
    w2b = _band_conv_weights(w2, W, mxu_dtype)                             # (3, W*Cmid, W*Cout)

    operands = (x2, g1l, b1l, m1, wsd, w1b, g2l, b2l, m2, w2b)

    flops = 2 * NH * (3 * (W * Cin) * (W * Cmid) + 3 * (W * Cmid) * (W * Cout)
                      + (W * Cin) * (W * Cout))
    bytes_accessed = int(sum(int(a.size) * a.dtype.itemsize for a in operands)
                         + NH * W * Cout * 4)

    kern = functools.partial(preact_block_kernel, N=N, H=H, W=W,
                             pad_top=pad_top, mxu_dtype=mxu_dtype)
    vmem = pl.BlockSpec(memory_space=pltpu.MemorySpace.VMEM)

    out2 = pl.pallas_call(
        kern,
        out_shape=jax.ShapeDtypeStruct((NH, W * Cout), jnp.float32),
        in_specs=[vmem] * len(operands),
        out_specs=vmem,
        scratch_shapes=[pltpu.VMEM((N, pad_depth, W * Cin), mxu_dtype),
                        pltpu.VMEM((N, pad_depth, W * Cmid), mxu_dtype)],
        compiler_params=pltpu.CompilerParams(vmem_limit_bytes=32 * 1024 * 1024),
        cost_estimate=pl.CostEstimate(flops=int(flops),
                                      transcendentals=int(W * (Cin + Cmid)),
                                      bytes_accessed=bytes_accessed),
    )(*operands)

    return jnp.transpose(out2.reshape(N, H, W, Cout), (0, 3, 1, 2))


def ref_forward(x_nchw, params):
    """Pure-JAX reference with identical semantics (for verification)."""
    g1, b1, w_sc, w1, g2, b2, w2 = params
    x = jnp.transpose(x_nchw, (0, 2, 3, 1)).astype(jnp.float32)

    def bn_relu(t, g, b):
        m = jnp.mean(t, axis=(0, 1, 2))
        v = jnp.mean((t - m) ** 2, axis=(0, 1, 2))
        return jax.nn.relu((t - m) * lax.rsqrt(v + EPS) * g + b)

    def conv(t, w, pad):
        w_hwio = jnp.transpose(w, (2, 3, 1, 0)).astype(jnp.float32)
        return lax.conv_general_dilated(
            t, w_hwio, (1, 1), pad,
            dimension_numbers=('NHWC', 'HWIO', 'NHWC'),
            precision=lax.Precision.HIGHEST)

    a1 = bn_relu(x, g1, b1)
    sc = conv(a1, w_sc, ((0, 0), (0, 0)))
    o1 = conv(a1, w1, ((1, 1), (1, 1)))
    a2 = bn_relu(o1, g2, b2)
    o2 = conv(a2, w2, ((1, 1), (1, 1))) + sc
    return jnp.transpose(o2, (0, 3, 1, 2))


if __name__ == "__main__":
    # Small shapes consistent with the module: in_planes=4, planes=8, stride=1
    # (in_planes != planes => the 1x1 shortcut conv exists).
    N, in_planes, planes, H, W = 2, 4, 8, 16, 16

    key = jax.random.PRNGKey(0)
    keys = jax.random.split(key, 8)
    x = jax.random.normal(keys[0], (N, in_planes, H, W), jnp.float32)

    g1 = 1.0 + 0.1 * jax.random.normal(keys[1], (in_planes,), jnp.float32)
    b1 = 0.1 * jax.random.normal(keys[2], (in_planes,), jnp.float32)
    w1 = 0.2 * jax.random.normal(keys[3], (planes, in_planes, 3, 3), jnp.float32)
    g2 = 1.0 + 0.1 * jax.random.normal(keys[4], (planes,), jnp.float32)
    b2 = 0.1 * jax.random.normal(keys[5], (planes,), jnp.float32)
    w2 = 0.2 * jax.random.normal(keys[6], (planes, planes, 3, 3), jnp.float32)
    w_sc = 0.2 * jax.random.normal(keys[7], (planes, in_planes, 1, 1), jnp.float32)
    params = (g1, b1, w_sc, w1, g2, b2, w2)

    ref = jax.block_until_ready(ref_forward(x, params))

    # Strict correctness anchor: f32 MXU operands must match the f32 reference tightly.
    out_f32 = jax.block_until_ready(preact_block_forward(x, params, mxu_dtype=jnp.float32))
    assert out_f32.shape == (N, planes, H, W), out_f32.shape
    err_f32 = float(jnp.max(jnp.abs(out_f32 - ref)))
    if err_f32 > 1e-3:
        raise AssertionError(f"f32 kernel mismatch vs reference, max_err={err_f32}")

    # Performance configuration: bf16 MXU operands with f32 accumulation (v6e/v7x MXU peak);
    # tolerance reflects bf16 operand rounding only (structure already verified above).
    out_bf16 = jax.block_until_ready(preact_block_forward(x, params, mxu_dtype=jnp.bfloat16))
    err_bf16 = float(jnp.max(jnp.abs(out_bf16 - ref)))
    if err_bf16 > 1e-1:
        raise AssertionError(f"bf16 kernel mismatch vs reference, max_err={err_bf16}")

    print("KERNEL_OK")
</pallas_src>

<mosaic_0001>
module attributes {stable_mosaic.version = 11 : i64} {
  func.func @preact_block_kernel(%arg0: memref<32x64xf32, #tpu.memory_space<vmem>>, %arg1: memref<1x64xf32, #tpu.memory_space<vmem>>, %arg2: memref<1x64xf32, #tpu.memory_space<vmem>>, %arg3: memref<64x64xf32, #tpu.memory_space<vmem>>, %arg4: memref<64x128xf32, #tpu.memory_space<vmem>>, %arg5: memref<3x64x128xf32, #tpu.memory_space<vmem>>, %arg6: memref<1x128xf32, #tpu.memory_space<vmem>>, %arg7: memref<1x128xf32, #tpu.memory_space<vmem>>, %arg8: memref<128x128xf32, #tpu.memory_space<vmem>>, %arg9: memref<3x128x128xf32, #tpu.memory_space<vmem>>, %arg10: memref<32x128xf32, #tpu.memory_space<vmem>>, %arg11: memref<2x25x64xf32, #tpu.memory_space<vmem>>, %arg12: memref<2x25x128xf32, #tpu.memory_space<vmem>>) attributes {dimension_semantics = [], scalar_prefetch = 0 : i64, scratch_operands = 2 : i64, tpu.core_type = #tpu.core_type<tc>} {
    %c0 = arith.constant 0 : index
    %c0_0 = arith.constant 0 : index
    %0 = vector.load %arg0[%c0, %c0_0] : memref<32x64xf32, #tpu.memory_space<vmem>>, vector<32x64xf32>
    %cst = arith.constant dense<0.000000e+00> : vector<64xf32>
    %1 = vector.multi_reduction <add>, %0, %cst [0] : vector<32x64xf32> to vector<64xf32>
    %2 = vector.shape_cast %1 : vector<64xf32> to vector<1x64xf32>
    %c0_1 = arith.constant 0 : index
    %c0_2 = arith.constant 0 : index
    %3 = vector.load %arg3[%c0_1, %c0_2] : memref<64x64xf32, #tpu.memory_space<vmem>>, vector<64x64xf32>
    %cst_3 = arith.constant dense<0.000000e+00> : vector<1x64xf32>
    %4 = tpu.matmul %2, %3, %cst_3 {dimension_numbers = #tpu.dot_dimension_numbers<[1], [0], [0], [1], [0, 0, 1, 1], [], []>} : vector<1x64xf32>, vector<64x64xf32>, vector<1x64xf32> -> vector<1x64xf32>
    %5 = vector.broadcast %4 : vector<1x64xf32> to vector<32x64xf32>
    %6 = arith.subf %0, %5 : vector<32x64xf32>
    %7 = arith.mulf %6, %6 : vector<32x64xf32>
    %cst_4 = arith.constant dense<0.000000e+00> : vector<64xf32>
    %8 = vector.multi_reduction <add>, %7, %cst_4 [0] : vector<32x64xf32> to vector<64xf32>
    %9 = vector.shape_cast %8 : vector<64xf32> to vector<1x64xf32>
    %c0_5 = arith.constant 0 : index
    %c0_6 = arith.constant 0 : index
    %10 = vector.load %arg3[%c0_5, %c0_6] : memref<64x64xf32, #tpu.memory_space<vmem>>, vector<64x64xf32>
    %cst_7 = arith.constant dense<0.000000e+00> : vector<1x64xf32>
    %11 = tpu.matmul %9, %10, %cst_7 {dimension_numbers = #tpu.dot_dimension_numbers<[1], [0], [0], [1], [0, 0, 1, 1], [], []>} : vector<1x64xf32>, vector<64x64xf32>, vector<1x64xf32> -> vector<1x64xf32>
    %cst_8 = arith.constant 9.99999974E-6 : f32
    %12 = vector.broadcast %cst_8 : f32 to vector<1x64xf32>
    %13 = arith.addf %11, %12 : vector<1x64xf32>
    %14 = math.rsqrt %13 : vector<1x64xf32>
    %15 = vector.broadcast %14 : vector<1x64xf32> to vector<32x64xf32>
    %16 = arith.mulf %6, %15 : vector<32x64xf32>
    %c0_9 = arith.constant 0 : index
    %c0_10 = arith.constant 0 : index
    %17 = vector.load %arg1[%c0_9, %c0_10] : memref<1x64xf32, #tpu.memory_space<vmem>>, vector<1x64xf32>
    %18 = vector.broadcast %17 : vector<1x64xf32> to vector<32x64xf32>
    %19 = arith.mulf %16, %18 : vector<32x64xf32>
    %c0_11 = arith.constant 0 : index
    %c0_12 = arith.constant 0 : index
    %20 = vector.load %arg2[%c0_11, %c0_12] : memref<1x64xf32, #tpu.memory_space<vmem>>, vector<1x64xf32>
    %21 = vector.broadcast %20 : vector<1x64xf32> to vector<32x64xf32>
    %22 = arith.addf %19, %21 : vector<32x64xf32>
    %cst_13 = arith.constant 0.000000e+00 : f32
    %23 = vector.broadcast %cst_13 : f32 to vector<32x64xf32>
    %24 = arith.maximumf %22, %23 : vector<32x64xf32>
    %c0_14 = arith.constant 0 : index
    %c0_15 = arith.constant 0 : index
    %25 = vector.load %arg4[%c0_14, %c0_15] : memref<64x128xf32, #tpu.memory_space<vmem>>, vector<64x128xf32>
    %cst_16 = arith.constant dense<0.000000e+00> : vector<32x128xf32>
    %26 = tpu.matmul %24, %25, %cst_16 {dimension_numbers = #tpu.dot_dimension_numbers<[1], [0], [0], [1], [0, 0, 1, 1], [], []>} : vector<32x64xf32>, vector<64x128xf32>, vector<32x128xf32> -> vector<32x128xf32>
    %cst_17 = arith.constant 0.000000e+00 : f32
    %27 = vector.broadcast %cst_17 : f32 to vector<2x1x64xf32>
    %c0_18 = arith.constant 0 : index
    %c7 = arith.constant 7 : index
    %c0_19 = arith.constant 0 : index
    %28 = vector.load %arg11[%c0_18, %c7, %c0_19] : memref<2x25x64xf32, #tpu.memory_space<vmem>>, vector<2x1x64xf32>
    tpu.vector_store %arg11[%c0_18, %c7, %c0_19], %27 {strides = array<i32>} : memref<2x25x64xf32, #tpu.memory_space<vmem>>, vector<2x1x64xf32>,
    %c0_20 = arith.constant 0 : index
    %c24 = arith.constant 24 : index
    %c0_21 = arith.constant 0 : index
    %29 = vector.load %arg11[%c0_20, %c24, %c0_21] : memref<2x25x64xf32, #tpu.memory_space<vmem>>, vector<2x1x64xf32>
    tpu.vector_store %arg11[%c0_20, %c24, %c0_21], %27 {strides = array<i32>} : memref<2x25x64xf32, #tpu.memory_space<vmem>>, vector<2x1x64xf32>,
    %30 = vector.shape_cast %24 : vector<32x64xf32> to vector<2x16x64xf32>
    %c0_22 = arith.constant 0 : index
    %c8 = arith.constant 8 : index
    %c0_23 = arith.constant 0 : index
    %31 = vector.load %arg11[%c0_22, %c8, %c0_23] : memref<2x25x64xf32, #tpu.memory_space<vmem>>, vector<2x16x64xf32>
    tpu.vector_store %arg11[%c0_22, %c8, %c0_23], %30 {strides = array<i32>} : memref<2x25x64xf32, #tpu.memory_space<vmem>>, vector<2x16x64xf32>,
    %c0_24 = arith.constant 0 : index
    %c7_25 = arith.constant 7 : index
    %c0_26 = arith.constant 0 : index
    %32 = vector.load %arg11[%c0_24, %c7_25, %c0_26] : memref<2x25x64xf32, #tpu.memory_space<vmem>>, vector<2x16x64xf32>
    %33 = vector.shape_cast %32 : vector<2x16x64xf32> to vector<32x64xf32>
    %c0_27 = arith.constant 0 : index
    %c0_28 = arith.constant 0 : index
    %c0_29 = arith.constant 0 : index
    %34 = vector.load %arg5[%c0_27, %c0_28, %c0_29] : memref<3x64x128xf32, #tpu.memory_space<vmem>>, vector<1x64x128xf32>
    %35 = vector.shape_cast %34 : vector<1x64x128xf32> to vector<64x128xf32>
    %cst_30 = arith.constant dense<0.000000e+00> : vector<32x128xf32>
    %36 = tpu.matmul %33, %35, %cst_30 {dimension_numbers = #tpu.dot_dimension_numbers<[1], [0], [0], [1], [0, 0, 1, 1], [], []>} : vector<32x64xf32>, vector<64x128xf32>, vector<32x128xf32> -> vector<32x128xf32>
    %c0_31 = arith.constant 0 : index
    %c8_32 = arith.constant 8 : index
    %c0_33 = arith.constant 0 : index
    %37 = vector.load %arg11[%c0_31, %c8_32, %c0_33] : memref<2x25x64xf32, #tpu.memory_space<vmem>>, vector<2x16x64xf32>
    %38 = vector.shape_cast %37 : vector<2x16x64xf32> to vector<32x64xf32>
    %c1 = arith.constant 1 : index
    %c0_34 = arith.constant 0 : index
    %c0_35 = arith.constant 0 : index
    %39 = vector.load %arg5[%c1, %c0_34, %c0_35] : memref<3x64x128xf32, #tpu.memory_space<vmem>>, vector<1x64x128xf32>
    %40 = vector.shape_cast %39 : vector<1x64x128xf32> to vector<64x128xf32>
    %cst_36 = arith.constant dense<0.000000e+00> : vector<32x128xf32>
    %41 = tpu.matmul %38, %40, %cst_36 {dimension_numbers = #tpu.dot_dimension_numbers<[1], [0], [0], [1], [0, 0, 1, 1], [], []>} : vector<32x64xf32>, vector<64x128xf32>, vector<32x128xf32> -> vector<32x128xf32>
    %42 = arith.addf %36, %41 : vector<32x128xf32>
    %c0_37 = arith.constant 0 : index
    %c9 = arith.constant 9 : index
    %c0_38 = arith.constant 0 : index
    %43 = vector.load %arg11[%c0_37, %c9, %c0_38] : memref<2x25x64xf32, #tpu.memory_space<vmem>>, vector<2x16x64xf32>
    %44 = vector.shape_cast %43 : vector<2x16x64xf32> to vector<32x64xf32>
    %c2 = arith.constant 2 : index
    %c0_39 = arith.constant 0 : index
    %c0_40 = arith.constant 0 : index
    %45 = vector.load %arg5[%c2, %c0_39, %c0_40] : memref<3x64x128xf32, #tpu.memory_space<vmem>>, vector<1x64x128xf32>
    %46 = vector.shape_cast %45 : vector<1x64x128xf32> to vector<64x128xf32>
    %cst_41 = arith.constant dense<0.000000e+00> : vector<32x128xf32>
    %47 = tpu.matmul %44, %46, %cst_41 {dimension_numbers = #tpu.dot_dimension_numbers<[1], [0], [0], [1], [0, 0, 1, 1], [], []>} : vector<32x64xf32>, vector<64x128xf32>, vector<32x128xf32> -> vector<32x128xf32>
    %48 = arith.addf %42, %47 : vector<32x128xf32>
    %cst_42 = arith.constant dense<0.000000e+00> : vector<128xf32>
    %49 = vector.multi_reduction <add>, %48, %cst_42 [0] : vector<32x128xf32> to vector<128xf32>
    %50 = vector.shape_cast %49 : vector<128xf32> to vector<1x128xf32>
    %c0_43 = arith.constant 0 : index
    %c0_44 = arith.constant 0 : index
    %51 = vector.load %arg8[%c0_43, %c0_44] : memref<128x128xf32, #tpu.memory_space<vmem>>, vector<128x128xf32>
    %cst_45 = arith.constant dense<0.000000e+00> : vector<1x128xf32>
    %52 = tpu.matmul %50, %51, %cst_45 {dimension_numbers = #tpu.dot_dimension_numbers<[1], [0], [0], [1], [0, 0, 1, 1], [], []>} : vector<1x128xf32>, vector<128x128xf32>, vector<1x128xf32> -> vector<1x128xf32>
    %53 = vector.broadcast %52 : vector<1x128xf32> to vector<32x128xf32>
    %54 = arith.subf %48, %53 : vector<32x128xf32>
    %55 = arith.mulf %54, %54 : vector<32x128xf32>
    %cst_46 = arith.constant dense<0.000000e+00> : vector<128xf32>
    %56 = vector.multi_reduction <add>, %55, %cst_46 [0] : vector<32x128xf32> to vector<128xf32>
    %57 = vector.shape_cast %56 : vector<128xf32> to vector<1x128xf32>
    %c0_47 = arith.constant 0 : index
    %c0_48 = arith.constant 0 : index
    %58 = vector.load %arg8[%c0_47, %c0_48] : memref<128x128xf32, #tpu.memory_space<vmem>>, vector<128x128xf32>
    %cst_49 = arith.constant dense<0.000000e+00> : vector<1x128xf32>
    %59 = tpu.matmul %57, %58, %cst_49 {dimension_numbers = #tpu.dot_dimension_numbers<[1], [0], [0], [1], [0, 0, 1, 1], [], []>} : vector<1x128xf32>, vector<128x128xf32>, vector<1x128xf32> -> vector<1x128xf32>
    %cst_50 = arith.constant 9.99999974E-6 : f32
    %60 = vector.broadcast %cst_50 : f32 to vector<1x128xf32>
    %61 = arith.addf %59, %60 : vector<1x128xf32>
    %62 = math.rsqrt %61 : vector<1x128xf32>
    %63 = vector.broadcast %62 : vector<1x128xf32> to vector<32x128xf32>
    %64 = arith.mulf %54, %63 : vector<32x128xf32>
    %c0_51 = arith.constant 0 : index
    %c0_52 = arith.constant 0 : index
    %65 = vector.load %arg6[%c0_51, %c0_52] : memref<1x128xf32, #tpu.memory_space<vmem>>, vector<1x128xf32>
    %66 = vector.broadcast %65 : vector<1x128xf32> to vector<32x128xf32>
    %67 = arith.mulf %64, %66 : vector<32x128xf32>
    %c0_53 = arith.constant 0 : index
    %c0_54 = arith.constant 0 : index
    %68 = vector.load %arg7[%c0_53, %c0_54] : memref<1x128xf32, #tpu.memory_space<vmem>>, vector<1x128xf32>
    %69 = vector.broadcast %68 : vector<1x128xf32> to vector<32x128xf32>
    %70 = arith.addf %67, %69 : vector<32x128xf32>
    %cst_55 = arith.constant 0.000000e+00 : f32
    %71 = vector.broadcast %cst_55 : f32 to vector<32x128xf32>
    %72 = arith.maximumf %70, %71 : vector<32x128xf32>
    %cst_56 = arith.constant 0.000000e+00 : f32
    %73 = vector.broadcast %cst_56 : f32 to vector<2x1x128xf32>
    %c0_57 = arith.constant 0 : index
    %c7_58 = arith.constant 7 : index
    %c0_59 = arith.constant 0 : index
    %74 = vector.load %arg12[%c0_57, %c7_58, %c0_59] : memref<2x25x128xf32, #tpu.memory_space<vmem>>, vector<2x1x128xf32>
    tpu.vector_store %arg12[%c0_57, %c7_58, %c0_59], %73 {strides = array<i32>} : memref<2x25x128xf32, #tpu.memory_space<vmem>>, vector<2x1x128xf32>,
    %c0_60 = arith.constant 0 : index
    %c24_61 = arith.constant 24 : index
    %c0_62 = arith.constant 0 : index
    %75 = vector.load %arg12[%c0_60, %c24_61, %c0_62] : memref<2x25x128xf32, #tpu.memory_space<vmem>>, vector<2x1x128xf32>
    tpu.vector_store %arg12[%c0_60, %c24_61, %c0_62], %73 {strides = array<i32>} : memref<2x25x128xf32, #tpu.memory_space<vmem>>, vector<2x1x128xf32>,
    %76 = vector.shape_cast %72 : vector<32x128xf32> to vector<2x16x128xf32>
    %c0_63 = arith.constant 0 : index
    %c8_64 = arith.constant 8 : index
    %c0_65 = arith.constant 0 : index
    %77 = vector.load %arg12[%c0_63, %c8_64, %c0_65] : memref<2x25x128xf32, #tpu.memory_space<vmem>>, vector<2x16x128xf32>
    tpu.vector_store %arg12[%c0_63, %c8_64, %c0_65], %76 {strides = array<i32>} : memref<2x25x128xf32, #tpu.memory_space<vmem>>, vector<2x16x128xf32>,
    %c0_66 = arith.constant 0 : index
    %c7_67 = arith.constant 7 : index
    %c0_68 = arith.constant 0 : index
    %78 = vector.load %arg12[%c0_66, %c7_67, %c0_68] : memref<2x25x128xf32, #tpu.memory_space<vmem>>, vector<2x16x128xf32>
    %79 = vector.shape_cast %78 : vector<2x16x128xf32> to vector<32x128xf32>
    %c0_69 = arith.constant 0 : index
    %c0_70 = arith.constant 0 : index
    %c0_71 = arith.constant 0 : index
    %80 = vector.load %arg9[%c0_69, %c0_70, %c0_71] : memref<3x128x128xf32, #tpu.memory_space<vmem>>, vector<1x128x128xf32>
    %81 = vector.shape_cast %80 : vector<1x128x128xf32> to vector<128x128xf32>
    %cst_72 = arith.constant dense<0.000000e+00> : vector<32x128xf32>
    %82 = tpu.matmul %79, %81, %cst_72 {dimension_numbers = #tpu.dot_dimension_numbers<[1], [0], [0], [1], [0, 0, 1, 1], [], []>} : vector<32x128xf32>, vector<128x128xf32>, vector<32x128xf32> -> vector<32x128xf32>
    %83 = arith.addf %82, %26 : vector<32x128xf32>
    %c0_73 = arith.constant 0 : index
    %c8_74 = arith.constant 8 : index
    %c0_75 = arith.constant 0 : index
    %84 = vector.load %arg12[%c0_73, %c8_74, %c0_75] : memref<2x25x128xf32, #tpu.memory_space<vmem>>, vector<2x16x128xf32>
    %85 = vector.shape_cast %84 : vector<2x16x128xf32> to vector<32x128xf32>
    %c1_76 = arith.constant 1 : index
    %c0_77 = arith.constant 0 : index
    %c0_78 = arith.constant 0 : index
    %86 = vector.load %arg9[%c1_76, %c0_77, %c0_78] : memref<3x128x128xf32, #tpu.memory_space<vmem>>, vector<1x128x128xf32>
    %87 = vector.shape_cast %86 : vector<1x128x128xf32> to vector<128x128xf32>
    %cst_79 = arith.constant dense<0.000000e+00> : vector<32x128xf32>
    %88 = tpu.matmul %85, %87, %cst_79 {dimension_numbers = #tpu.dot_dimension_numbers<[1], [0], [0], [1], [0, 0, 1, 1], [], []>} : vector<32x128xf32>, vector<128x128xf32>, vector<32x128xf32> -> vector<32x128xf32>
    %89 = arith.addf %83, %88 : vector<32x128xf32>
    %c0_80 = arith.constant 0 : index
    %c9_81 = arith.constant 9 : index
    %c0_82 = arith.constant 0 : index
    %90 = vector.load %arg12[%c0_80, %c9_81, %c0_82] : memref<2x25x128xf32, #tpu.memory_space<vmem>>, vector<2x16x128xf32>
    %91 = vector.shape_cast %90 : vector<2x16x128xf32> to vector<32x128xf32>
    %c2_83 = arith.constant 2 : index
    %c0_84 = arith.constant 0 : index
    %c0_85 = arith.constant 0 : index
    %92 = vector.load %arg9[%c2_83, %c0_84, %c0_85] : memref<3x128x128xf32, #tpu.memory_space<vmem>>, vector<1x128x128xf32>
    %93 = vector.shape_cast %92 : vector<1x128x128xf32> to vector<128x128xf32>
    %cst_86 = arith.constant dense<0.000000e+00> : vector<32x128xf32>
    %94 = tpu.matmul %91, %93, %cst_86 {dimension_numbers = #tpu.dot_dimension_numbers<[1], [0], [0], [1], [0, 0, 1, 1], [], []>} : vector<32x128xf32>, vector<128x128xf32>, vector<32x128xf32> -> vector<32x128xf32>
    %95 = arith.addf %89, %94 : vector<32x128xf32>
    %c0_87 = arith.constant 0 : index
    %c0_88 = arith.constant 0 : index
    %96 = vector.load %arg10[%c0_87, %c0_88] : memref<32x128xf32, #tpu.memory_space<vmem>>, vector<32x128xf32>
    tpu.vector_store %arg10[%c0_87, %c0_88], %95 {strides = array<i32>} : memref<32x128xf32, #tpu.memory_space<vmem>>, vector<32x128xf32>,
    return
  }
}

</mosaic_0001>

<llo_original>
// kernel: tpu_custom_call.1
$region0: #{tpu_custom_call.1}
  #allocation0 [shape = 'u32[]', space=smem, size = 0x4, offset = 0x4, fixed_abs, tag = 'smem constant byte address 0x4 - core index']
  #allocation1 [shape = 'u32[144,128]{1,0:T(1,128)}', space=vmem, size = 0x12000, scoped, tag = 'internal scratch']
  #allocation2 [shape = 'f32[2,25,64]{2,1,0:T(8,128)}', space=vmem, size = 0x8000, scoped, tag = 'scratch operand']
  #allocation3 [shape = 'f32[2,25,128]{2,1,0:T(8,128)}', space=vmem, size = 0x8000, scoped, tag = 'scratch operand']
  %s0 = inlined_call_operand.hbm [shape: f32[32,64], index: 0, kind: input, shape index: {}]
  %s1 = inlined_call_operand.vmem [shape: f32[1,64], index: 1, kind: input, shape index: {}]
  %s2 = inlined_call_operand.vmem [shape: f32[1,64], index: 2, kind: input, shape index: {}]
  %s3 = inlined_call_operand.hbm [shape: f32[64,64], index: 3, kind: input, shape index: {}]
  %s4 = inlined_call_operand.hbm [shape: f32[64,128], index: 4, kind: input, shape index: {}]
  %s5 = inlined_call_operand.hbm [shape: f32[3,64,128], index: 5, kind: input, shape index: {}]
  %s6 = inlined_call_operand.vmem [shape: f32[1,128], index: 6, kind: input, shape index: {}]
  %s7 = inlined_call_operand.vmem [shape: f32[1,128], index: 7, kind: input, shape index: {}]
  %s8 = inlined_call_operand.hbm [shape: f32[128,128], index: 8, kind: input, shape index: {}]
  %s9 = inlined_call_operand.hbm [shape: f32[3,128,128], index: 9, kind: input, shape index: {}]
  %s10 = inlined_call_operand.hbm [shape: f32[32,128], index: 10, kind: output, shape index: {}]
  %s11 = sld [smem:[#allocation0]]
  $region74: #{tpu_custom_call.1} parent=0
    _
  %s13 = ssub.s32 1, %s11
  %s14 = scalar_select 0, %s13, %s11
  $region1: #{tpu_custom_call.1} parent=0
    #allocation4 [shape = 'u8[16384]{0}', space=vmem, size = 0x4000, scoped, tag = 'input window, operand 0, single buffered']
    #allocation5 [shape = 's32[1]{0}', space=sflag, size = 0x4, scoped, tag = 'scoped memory for tpu_custom_call.1']
    #allocation6 [shape = 's32[1]{0}', space=sflag, size = 0x4, scoped, tag = 'scoped memory for tpu_custom_call.1']
    #allocation7 [shape = 'u8[32768]{0}', space=vmem, size = 0x8000, scoped, tag = 'input window, operand 3, single buffered']
    #allocation8 [shape = 's32[1]{0}', space=sflag, size = 0x4, scoped, tag = 'scoped memory for tpu_custom_call.1']
    #allocation9 [shape = 'u8[32768]{0}', space=vmem, size = 0x8000, scoped, tag = 'input window, operand 4, single buffered']
    #allocation10 [shape = 'u8[98304]{0}', space=vmem, size = 0x18000, scoped, tag = 'input window, operand 5, single buffered']
    #allocation11 [shape = 's32[1]{0}', space=sflag, size = 0x4, scoped, tag = 'scoped memory for tpu_custom_call.1']
    #allocation12 [shape = 'u8[65536]{0}', space=vmem, size = 0x10000, scoped, tag = 'input window, operand 8, single buffered']
    #allocation13 [shape = 'u8[196608]{0}', space=vmem, size = 0x30000, scoped, tag = 'input window, operand 9, single buffered']
    #allocation14 [shape = 's32[1]{0}', space=sflag, size = 0x4, scoped, tag = 'scoped memory for tpu_custom_call.1']
    #allocation15 [shape = 'u8[16384]{0}', space=vmem, size = 0x4000, scoped, tag = 'output window, operand 0, single buffered']
    %15 = vsyncpa [#allocation5], 0
    %16 = vsyncpa [#allocation8], 0
    %17 = vsyncpa [#allocation11], 0
    %18 = vsyncpa [#allocation14], 0
    %19 = vsyncpa [#allocation6], 0
    // Predicated region
    $region2: #{tpu_custom_call.1} parent=1 // pred_check
      _
    $region3: #{tpu_custom_call.1} parent=1 // pred_check_branch
      %21 = sbr.rel (0) target = $region5
    $region4: #{tpu_custom_call.1} parent=1 // pred_region
      %s23 = ssub.s32 512, 512
      %24 = vsyncadd [#allocation5], %s23
      %s25 = sshll.u32 [#allocation4], 4
      %s26 = int_to_ptr.vmem [resolvable:$true] %s25
      %31 = dma.hbm_to_vmem [thread:$0]  %s0, 512, %s26, [#allocation5], 128, 128, 8
    $region5: #{tpu_custom_call.1} parent=1 // pred_fallthru
      _
    // Predicated region
    $region6: #{tpu_custom_call.1} parent=1 // pred_check
      _
    $region7: #{tpu_custom_call.1} parent=1 // pred_check_branch
      %33 = sbr.rel (0) target = $region9
    $region8: #{tpu_custom_call.1} parent=1 // pred_region
      _
    $region9: #{tpu_custom_call.1} parent=1 // pred_fallthru
      _
    // Predicated region
    $region10: #{tpu_custom_call.1} parent=1 // pred_check
      _
    $region11: #{tpu_custom_call.1} parent=1 // pred_check_branch
      %35 = sbr.rel (0) target = $region13
    $region12: #{tpu_custom_call.1} parent=1 // pred_region
      _
    $region13: #{tpu_custom_call.1} parent=1 // pred_fallthru
      _
    // Predicated region
    $region14: #{tpu_custom_call.1} parent=1 // pred_check
      _
    $region15: #{tpu_custom_call.1} parent=1 // pred_check_branch
      %37 = sbr.rel (0) target = $region17
    $region16: #{tpu_custom_call.1} parent=1 // pred_region
      %s39 = ssub.s32 1024, 1024
      %40 = vsyncadd [#allocation8], %s39
      %s41 = sshll.u32 [#allocation7], 4
      %s42 = int_to_ptr.vmem [resolvable:$true] %s41
      %47 = dma.hbm_to_vmem [thread:$0]  %s3, 1024, %s42, [#allocation8], 128, 128, 8
    $region17: #{tpu_custom_call.1} parent=1 // pred_fallthru
      _
    // Predicated region
    $region18: #{tpu_custom_call.1} parent=1 // pred_check
      _
    $region19: #{tpu_custom_call.1} parent=1 // pred_check_branch
      %49 = sbr.rel (0) target = $region21
    $region20: #{tpu_custom_call.1} parent=1 // pred_region
      %s51 = ssub.s32 1024, 1024
      %52 = vsyncadd [#allocation8], %s51
      %s53 = sshll.u32 [#allocation9], 4
      %s54 = int_to_ptr.vmem [resolvable:$true] %s53
      %59 = dma.hbm_to_vmem [thread:$0]  %s4, 1024, %s54, [#allocation8], 128, 128, 8
    $region21: #{tpu_custom_call.1} parent=1 // pred_fallthru
      _
    // Predicated region
    $region22: #{tpu_custom_call.1} parent=1 // pred_check
      _
    $region23: #{tpu_custom_call.1} parent=1 // pred_check_branch
      %61 = sbr.rel (0) target = $region25
    $region24: #{tpu_custom_call.1} parent=1 // pred_region
      %s63 = ssub.s32 3072, 3072
      %64 = vsyncadd [#allocation11], %s63
      %s65 = sshll.u32 [#allocation10], 4
      %s66 = int_to_ptr.vmem [resolvable:$true] %s65
      %71 = dma.hbm_to_vmem [thread:$0]  %s5, 3072, %s66, [#allocation11], 128, 128, 8
    $region25: #{tpu_custom_call.1} parent=1 // pred_fallthru
      _
    // Predicated region
    $region26: #{tpu_custom_call.1} parent=1 // pred_check
      _
    $region27: #{tpu_custom_call.1} parent=1 // pred_check_branch
      %73 = sbr.rel (0) target = $region29
    $region28: #{tpu_custom_call.1} parent=1 // pred_region
      _
    $region29: #{tpu_custom_call.1} parent=1 // pred_fallthru
      _
    // Predicated region
    $region30: #{tpu_custom_call.1} parent=1 // pred_check
      _
    $region31: #{tpu_custom_call.1} parent=1 // pred_check_branch
      %75 = sbr.rel (0) target = $region33
    $region32: #{tpu_custom_call.1} parent=1 // pred_region
      _
    $region33: #{tpu_custom_call.1} parent=1 // pred_fallthru
      _
    // Predicated region
    $region34: #{tpu_custom_call.1} parent=1 // pred_check
      _
    $region35: #{tpu_custom_call.1} parent=1 // pred_check_branch
      %77 = sbr.rel (0) target = $region37
    $region36: #{tpu_custom_call.1} parent=1 // pred_region
      %s79 = ssub.s32 2048, 2048
      %80 = vsyncadd [#allocation11], %s79
      %s81 = sshll.u32 [#allocation12], 4
      %s82 = int_to_ptr.vmem [resolvable:$true] %s81
      %87 = dma.hbm_to_vmem [thread:$0]  %s8, 2048, %s82, [#allocation11], 128, 128, 8
    $region37: #{tpu_custom_call.1} parent=1 // pred_fallthru
      _
    // Predicated region
    $region38: #{tpu_custom_call.1} parent=1 // pred_check
      _
    $region39: #{tpu_custom_call.1} parent=1 // pred_check_branch
      %89 = sbr.rel (0) target = $region41
    $region40: #{tpu_custom_call.1} parent=1 // pred_region
      %s91 = ssub.s32 6144, 6144
      %92 = vsyncadd [#allocation14], %s91
      %s93 = sshll.u32 [#allocation13], 4
      %s94 = int_to_ptr.vmem [resolvable:$true] %s93
      %99 = dma.hbm_to_vmem [thread:$0]  %s9, 6144, %s94, [#allocation14], 128, 128, 8
    $region41: #{tpu_custom_call.1} parent=1 // pred_fallthru
      _
    // Predicated region
    $region42: #{tpu_custom_call.1} parent=1 // pred_check
      _
    $region43: #{tpu_custom_call.1} parent=1 // pred_check_branch
      %101 = sbr.rel (0) target = $region45
    $region44: #{tpu_custom_call.1} parent=1 // pred_region
      %102 = dma.done [#allocation5], 512
    $region45: #{tpu_custom_call.1} parent=1 // pred_fallthru
      _
    // Predicated region
    $region46: #{tpu_custom_call.1} parent=1 // pred_check
      _
    $region47: #{tpu_custom_call.1} parent=1 // pred_check_branch
      %104 = sbr.rel (0) target = $region49
    $region48: #{tpu_custom_call.1} parent=1 // pred_region
      %105 = dma.done [#allocation8], 1024
    $region49: #{tpu_custom_call.1} parent=1 // pred_fallthru
      _
    // Predicated region
    $region50: #{tpu_custom_call.1} parent=1 // pred_check
      _
    $region51: #{tpu_custom_call.1} parent=1 // pred_check_branch
      %107 = sbr.rel (0) target = $region53
    $region52: #{tpu_custom_call.1} parent=1 // pred_region
      %108 = dma.done [#allocation8], 1024
    $region53: #{tpu_custom_call.1} parent=1 // pred_fallthru
      _
    // Predicated region
    $region54: #{tpu_custom_call.1} parent=1 // pred_check
      _
    $region55: #{tpu_custom_call.1} parent=1 // pred_check_branch
      %110 = sbr.rel (0) target = $region57
    $region56: #{tpu_custom_call.1} parent=1 // pred_region
      %111 = dma.done [#allocation11], 3072
    $region57: #{tpu_custom_call.1} parent=1 // pred_fallthru
      _
    // Predicated region
    $region58: #{tpu_custom_call.1} parent=1 // pred_check
      _
    $region59: #{tpu_custom_call.1} parent=1 // pred_check_branch
      %113 = sbr.rel (0) target = $region61
    $region60: #{tpu_custom_call.1} parent=1 // pred_region
      %114 = dma.done [#allocation11], 2048
    $region61: #{tpu_custom_call.1} parent=1 // pred_fallthru
      _
    // Predicated region
    $region62: #{tpu_custom_call.1} parent=1 // pred_check
      _
    $region63: #{tpu_custom_call.1} parent=1 // pred_check_branch
      %116 = sbr.rel (0) target = $region65
    $region64: #{tpu_custom_call.1} parent=1 // pred_region
      %117 = dma.done [#allocation14], 6144
    $region65: #{tpu_custom_call.1} parent=1 // pred_fallthru
      _
    %v118 = vld [vmem:[#allocation4] sm:$0xff]
    %v119 = vld [vmem:[#allocation4 + $0x8] sm:$0xff]
    %v120 = vld [vmem:[#allocation4 + $0x10] sm:$0xff]
    %v121 = vld [vmem:[#allocation4 + $0x18] sm:$0xff]
    %vm122 = vcmask 523264
    %v123 = vsel %vm122, %v118, 0.0
    %v124 = vsel %vm122, %v119, 0.0
    %v125 = vadd.f32 %v123, %v124
    %v126 = vsel %vm122, %v120, 0.0
    %v127 = vadd.f32 %v125, %v126
    %v128 = vsel %vm122, %v121, 0.0
    %v129 = vadd.f32 %v127, %v128
    %v130 = vrot.slane %v129, 4
    %v131 = vadd.f32 %v129, %v130
    %v132 = vrot.slane %v131, 2
    %v133 = vadd.f32 %v131, %v132
    %v134 = vrot.slane %v133, 1
    %v135 = vadd.f32 %v133, %v134
    %v136 = vld [vmem:[#allocation7] sm:$0xff]
    %v137 = vld [vmem:[#allocation7 + $0x8] sm:$0xff]
    %v138 = vld [vmem:[#allocation7 + $0x10] sm:$0xff]
    %v139 = vld [vmem:[#allocation7 + $0x18] sm:$0xff]
    %v140 = vld [vmem:[#allocation7 + $0x20] sm:$0xff]
    %v141 = vld [vmem:[#allocation7 + $0x28] sm:$0xff]
    %v142 = vld [vmem:[#allocation7 + $0x30] sm:$0xff]
    %v143 = vld [vmem:[#allocation7 + $0x38] sm:$0xff]
    %v145 = vsel %vm122, %v135, 0
    %147 = vmatprep.subr.mxu0 0.0
    %148 = vmatpush1.msra.mxu0 %v136
    %149 = vmatprep.subr.mxu0 0.0
    %150 = vmatpush1.msra.mxu0 %v137
    %151 = vmatprep.subr.mxu0 0.0
    %152 = vmatpush1.msra.mxu0 %v138
    %153 = vmatprep.subr.mxu0 0.0
    %154 = vmatpush1.msra.mxu0 %v139
    %155 = vmatprep.subr.mxu0 0.0
    %156 = vmatpush1.msra.mxu0 %v140
    %157 = vmatprep.subr.mxu0 0.0
    %158 = vmatpush1.msra.mxu0 %v141
    %159 = vmatprep.subr.mxu0 0.0
    %160 = vmatpush1.msra.mxu0 %v142
    %161 = vmatprep.subr.mxu0 0.0
    %162 = vmatpush1.msra.mxu0 %v143
    %163 = vmatprep.subr.mxu0 0.0
    %164 = vmatpush1.msra.mxu0 0.0
    %165 = vmatprep.subr.mxu0 0.0
    %166 = vmatpush1.msra.mxu0 0.0
    %167 = vmatprep.subr.mxu0 0.0
    %168 = vmatpush1.msra.mxu0 0.0
    %169 = vmatprep.subr.mxu0 0.0
    %170 = vmatpush1.msra.mxu0 0.0
    %171 = vmatprep.subr.mxu0 0.0
    %172 = vmatpush1.msra.mxu0 0.0
    %173 = vmatprep.subr.mxu0 0.0
    %174 = vmatpush1.msra.mxu0 0.0
    %175 = vmatprep.subr.mxu0 0.0
    %176 = vmatpush1.msra.mxu0 0.0
    %177 = vmatprep.subr.mxu0 0.0
    %178 = vmatpush1.msra.mxu0 0.0
    %179 = vmatprep.subr.mxu0 0.0
    %180 = vmatpush1.msra.mxu0 0.0
    %181 = vmatprep.subr.mxu0 0.0
    %182 = vmatpush1.msra.mxu0 0.0
    %183 = vmatprep.subr.mxu0 0.0
    %184 = vmatpush1.msra.mxu0 0.0
    %185 = vmatprep.subr.mxu0 0.0
    %186 = vmatpush1.msra.mxu0 0.0
    %187 = vmatprep.subr.mxu0 0.0
    %188 = vmatpush1.msra.mxu0 0.0
    %189 = vmatprep.subr.mxu0 0.0
    %190 = vmatpush1.msra.mxu0 0.0
    %191 = vmatprep.subr.mxu0 0.0
    %192 = vmatpush1.msra.mxu0 0.0
    %193 = vmatprep.subr.mxu0 0.0
    %194 = vmatpush1.msra.mxu0 0.0
    %195 = vmatprep.subr.mxu0 0.0
    %196 = vmatpush1.msra.mxu0 0.0
    %197 = vmatprep.subr.mxu0 0.0
    %198 = vmatpush1.msra.mxu0 0.0
    %199 = vmatprep.subr.mxu0 0.0
    %200 = vmatpush1.msra.mxu0 0.0
    %201 = vmatprep.subr.mxu0 0.0
    %202 = vmatpush1.msra.mxu0 0.0
    %203 = vmatprep.subr.mxu0 0.0
    %204 = vmatpush1.msra.mxu0 0.0
    %205 = vmatprep.subr.mxu0 0.0
    %206 = vmatpush1.msra.mxu0 0.0
    %207 = vmatprep.subr.mxu0 0.0
    %208 = vmatpush1.msra.mxu0 0.0
    %209 = vmatprep.subr.mxu0 0.0
    %210 = vmatpush1.msra.mxu0 0.0
    %211 = vmatprep.mubr.f32.mxu0 0.0
    %212 = vmatmul.mubr.f32.gmra.mrb[0].mxu0 %v145
    %v213 = vpop.f32.mrb[0].mxu0
    %v214 = vadd.f32 0.0, %v213
    %v215 = vpop.f32.mrb[0].mxu0
    %216 = vdwg.mxu0
    %v217 = vlaneseq
    %v218 = vshrl.u32 %v217, 7
    %v219 = vsub.s32 0, %v218
    %v220 = vrot.slane %v214, %v219
    %v221 = vsub.f32 %v118, %v220
    %v222 = vsub.f32 %v119, %v220
    %v223 = vsub.f32 %v120, %v220
    %v224 = vsub.f32 %v121, %v220
    %v225 = vmul.f32 %v221, %v221
    %v226 = vmul.f32 %v222, %v222
    %v227 = vmul.f32 %v223, %v223
    %v228 = vmul.f32 %v224, %v224
    %v229 = vsel %vm122, %v225, 0.0
    %v230 = vsel %vm122, %v226, 0.0
    %v231 = vadd.f32 %v229, %v230
    %v232 = vsel %vm122, %v227, 0.0
    %v233 = vadd.f32 %v231, %v232
    %v234 = vsel %vm122, %v228, 0.0
    %v235 = vadd.f32 %v233, %v234
    %v236 = vrot.slane %v235, 4
    %v237 = vadd.f32 %v235, %v236
    %v238 = vrot.slane %v237, 2
    %v239 = vadd.f32 %v237, %v238
    %v240 = vrot.slane %v239, 1
    %v241 = vadd.f32 %v239, %v240
    %v243 = vsel %vm122, %v241, 0
    %245 = vmatprep.subr.mxu0 0.0
    %246 = vmatpush1.msra.mxu0 %v136
    %247 = vmatprep.subr.mxu0 0.0
    %248 = vmatpush1.msra.mxu0 %v137
    %249 = vmatprep.subr.mxu0 0.0
    %250 = vmatpush1.msra.mxu0 %v138
    %251 = vmatprep.subr.mxu0 0.0
    %252 = vmatpush1.msra.mxu0 %v139
    %253 = vmatprep.subr.mxu0 0.0
    %254 = vmatpush1.msra.mxu0 %v140
    %255 = vmatprep.subr.mxu0 0.0
    %256 = vmatpush1.msra.mxu0 %v141
    %257 = vmatprep.subr.mxu0 0.0
    %258 = vmatpush1.msra.mxu0 %v142
    %259 = vmatprep.subr.mxu0 0.0
    %260 = vmatpush1.msra.mxu0 %v143
    %261 = vmatprep.subr.mxu0 0.0
    %262 = vmatpush1.msra.mxu0 0.0
    %263 = vmatprep.subr.mxu0 0.0
    %264 = vmatpush1.msra.mxu0 0.0
    %265 = vmatprep.subr.mxu0 0.0
    %266 = vmatpush1.msra.mxu0 0.0
    %267 = vmatprep.subr.mxu0 0.0
    %268 = vmatpush1.msra.mxu0 0.0
    %269 = vmatprep.subr.mxu0 0.0
    %270 = vmatpush1.msra.mxu0 0.0
    %271 = vmatprep.subr.mxu0 0.0
    %272 = vmatpush1.msra.mxu0 0.0
    %273 = vmatprep.subr.mxu0 0.0
    %274 = vmatpush1.msra.mxu0 0.0
    %275 = vmatprep.subr.mxu0 0.0
    %276 = vmatpush1.msra.mxu0 0.0
    %277 = vmatprep.subr.mxu0 0.0
    %278 = vmatpush1.msra.mxu0 0.0
    %279 = vmatprep.subr.mxu0 0.0
    %280 = vmatpush1.msra.mxu0 0.0
    %281 = vmatprep.subr.mxu0 0.0
    %282 = vmatpush1.msra.mxu0 0.0
    %283 = vmatprep.subr.mxu0 0.0
    %284 = vmatpush1.msra.mxu0 0.0
    %285 = vmatprep.subr.mxu0 0.0
    %286 = vmatpush1.msra.mxu0 0.0
    %287 = vmatprep.subr.mxu0 0.0
    %288 = vmatpush1.msra.mxu0 0.0
    %289 = vmatprep.subr.mxu0 0.0
    %290 = vmatpush1.msra.mxu0 0.0
    %291 = vmatprep.subr.mxu0 0.0
    %292 = vmatpush1.msra.mxu0 0.0
    %293 = vmatprep.subr.mxu0 0.0
    %294 = vmatpush1.msra.mxu0 0.0
    %295 = vmatprep.subr.mxu0 0.0
    %296 = vmatpush1.msra.mxu0 0.0
    %297 = vmatprep.subr.mxu0 0.0
    %298 = vmatpush1.msra.mxu0 0.0
    %299 = vmatprep.subr.mxu0 0.0
    %300 = vmatpush1.msra.mxu0 0.0
    %301 = vmatprep.subr.mxu0 0.0
    %302 = vmatpush1.msra.mxu0 0.0
    %303 = vmatprep.subr.mxu0 0.0
    %304 = vmatpush1.msra.mxu0 0.0
    %305 = vmatprep.subr.mxu0 0.0
    %306 = vmatpush1.msra.mxu0 0.0
    %307 = vmatprep.subr.mxu0 0.0
    %308 = vmatpush1.msra.mxu0 0.0
    %309 = vmatprep.mubr.f32.mxu0 0.0
    %310 = vmatmul.mubr.f32.gmra.mrb[0].mxu0 %v243
    %v311 = vpop.f32.mrb[0].mxu0
    %v312 = vadd.f32 1e-05, %v311
    %v313 = vpop.f32.mrb[0].mxu0
    %314 = vdwg.mxu0
    %v315 = vrsqrt.pop %v312
    %v316 = vlaneseq
    %v317 = vshrl.u32 %v316, 7
    %v318 = vsub.s32 0, %v317
    %v319 = vrot.slane %v315, %v318
    %v320 = vmul.f32 %v221, %v319
    %v321 = vmul.f32 %v222, %v319
    %v322 = vmul.f32 %v223, %v319
    %v323 = vmul.f32 %v224, %v319
    %v324 = vld [vmem:[%s1] sm:$0x1]
    %v326 = vlaneseq
    %v327 = vshrl.u32 %v326, 7
    %v328 = vsub.s32 0, %v327
    %v329 = vrot.slane %v324, %v328
    %v331 = vmul.f32 %v320, %v329
    %v332 = vmul.f32 %v321, %v329
    %v333 = vmul.f32 %v322, %v329
    %v334 = vmul.f32 %v323, %v329
    %v335 = vld [vmem:[%s2] sm:$0x1]
    %v337 = vlaneseq
    %v338 = vshrl.u32 %v337, 7
    %v339 = vsub.s32 0, %v338
    %v340 = vrot.slane %v335, %v339
    %v342 = vadd.f32 %v331, %v340
    %v343 = vadd.f32 %v332, %v340
    %v344 = vadd.f32 %v333, %v340
    %v345 = vadd.f32 %v334, %v340
    %v346 = vmax.f32 %v342, 0.0
    %v347 = vmax.f32 %v343, 0.0
    %v348 = vmax.f32 %v344, 0.0
    %v349 = vmax.f32 %v345, 0.0
    %v350 = vld [vmem:[#allocation9] sm:$0xff]
    %v351 = vld [vmem:[#allocation9 + $0x8] sm:$0xff]
    %v352 = vld [vmem:[#allocation9 + $0x10] sm:$0xff]
    %v353 = vld [vmem:[#allocation9 + $0x18] sm:$0xff]
    %v354 = vld [vmem:[#allocation9 + $0x20] sm:$0xff]
    %v355 = vld [vmem:[#allocation9 + $0x28] sm:$0xff]
    %v356 = vld [vmem:[#allocation9 + $0x30] sm:$0xff]
    %v357 = vld [vmem:[#allocation9 + $0x38] sm:$0xff]
    %v359 = vsel %vm122, %v346, 0
    %v362 = vsel %vm122, %v347, 0
    %v365 = vsel %vm122, %v348, 0
    %v368 = vsel %vm122, %v349, 0
    %370 = vmatprep.subr.mxu0 0.0
    %371 = vmatpush1.msra.mxu0 %v350
    %372 = vmatprep.subr.mxu0 0.0
    %373 = vmatpush1.msra.mxu0 %v351
    %374 = vmatprep.subr.mxu0 0.0
    %375 = vmatpush1.msra.mxu0 %v352
    %376 = vmatprep.subr.mxu0 0.0
    %377 = vmatpush1.msra.mxu0 %v353
    %378 = vmatprep.subr.mxu0 0.0
    %379 = vmatpush1.msra.mxu0 %v354
    %380 = vmatprep.subr.mxu0 0.0
    %381 = vmatpush1.msra.mxu0 %v355
    %382 = vmatprep.subr.mxu0 0.0
    %383 = vmatpush1.msra.mxu0 %v356
    %384 = vmatprep.subr.mxu0 0.0
    %385 = vmatpush1.msra.mxu0 %v357
    %386 = vmatprep.subr.mxu0 0.0
    %387 = vmatpush1.msra.mxu0 0.0
    %388 = vmatprep.subr.mxu0 0.0
    %389 = vmatpush1.msra.mxu0 0.0
    %390 = vmatprep.subr.mxu0 0.0
    %391 = vmatpush1.msra.mxu0 0.0
    %392 = vmatprep.subr.mxu0 0.0
    %393 = vmatpush1.msra.mxu0 0.0
    %394 = vmatprep.subr.mxu0 0.0
    %395 = vmatpush1.msra.mxu0 0.0
    %396 = vmatprep.subr.mxu0 0.0
    %397 = vmatpush1.msra.mxu0 0.0
    %398 = vmatprep.subr.mxu0 0.0
    %399 = vmatpush1.msra.mxu0 0.0
    %400 = vmatprep.subr.mxu0 0.0
    %401 = vmatpush1.msra.mxu0 0.0
    %402 = vmatprep.subr.mxu0 0.0
    %403 = vmatpush1.msra.mxu0 0.0
    %404 = vmatprep.subr.mxu0 0.0
    %405 = vmatpush1.msra.mxu0 0.0
    %406 = vmatprep.subr.mxu0 0.0
    %407 = vmatpush1.msra.mxu0 0.0
    %408 = vmatprep.subr.mxu0 0.0
    %409 = vmatpush1.msra.mxu0 0.0
    %410 = vmatprep.subr.mxu0 0.0
    %411 = vmatpush1.msra.mxu0 0.0
    %412 = vmatprep.subr.mxu0 0.0
    %413 = vmatpush1.msra.mxu0 0.0
    %414 = vmatprep.subr.mxu0 0.0
    %415 = vmatpush1.msra.mxu0 0.0
    %416 = vmatprep.subr.mxu0 0.0
    %417 = vmatpush1.msra.mxu0 0.0
    %418 = vmatprep.subr.mxu0 0.0
    %419 = vmatpush1.msra.mxu0 0.0
    %420 = vmatprep.subr.mxu0 0.0
    %421 = vmatpush1.msra.mxu0 0.0
    %422 = vmatprep.subr.mxu0 0.0
    %423 = vmatpush1.msra.mxu0 0.0
    %424 = vmatprep.subr.mxu0 0.0
    %425 = vmatpush1.msra.mxu0 0.0
    %426 = vmatprep.subr.mxu0 0.0
    %427 = vmatpush1.msra.mxu0 0.0
    %428 = vmatprep.subr.mxu0 0.0
    %429 = vmatpush1.msra.mxu0 0.0
    %430 = vmatprep.subr.mxu0 0.0
    %431 = vmatpush1.msra.mxu0 0.0
    %432 = vmatprep.subr.mxu0 0.0
    %433 = vmatpush1.msra.mxu0 0.0
    %434 = vmatprep.mubr.f32.mxu0 0.0
    %435 = vmatmul.mubr.f32.gmra.mrb[0].mxu0 %v359
    %v436 = vpop.f32.mrb[0].mxu0
    %v437 = vadd.f32 0.0, %v436
    %v438 = vpop.f32.mrb[0].mxu0
    %439 = vmatprep.mubr.f32.mxu0 0.0
    %440 = vmatmul.mubr.f32.gmra.mrb[0].mxu0 %v362
    %v441 = vpop.f32.mrb[0].mxu0
    %v442 = vadd.f32 0.0, %v441
    %v443 = vpop.f32.mrb[0].mxu0
    %444 = vmatprep.mubr.f32.mxu0 0.0
    %445 = vmatmul.mubr.f32.gmra.mrb[0].mxu0 %v365
    %v446 = vpop.f32.mrb[0].mxu0
    %v447 = vadd.f32 0.0, %v446
    %v448 = vpop.f32.mrb[0].mxu0
    %449 = vmatprep.mubr.f32.mxu0 0.0
    %450 = vmatmul.mubr.f32.gmra.mrb[0].mxu0 %v368
    %v451 = vpop.f32.mrb[0].mxu0
    %v452 = vadd.f32 0.0, %v451
    %v453 = vpop.f32.mrb[0].mxu0
    %454 = vdwg.mxu0
    %vm455 = vcmask 516096
    %456 = vst.msk [vmem:[#allocation2 + $0x7] sm:$0x1] %vm455, 0.0
    %457 = vst.msk [vmem:[#allocation2 + $0x27] sm:$0x1] %vm455, 0.0
    %458 = vst.msk [vmem:[#allocation2 + $0x18] sm:$0x1] %vm455, 0.0
    %459 = vst.msk [vmem:[#allocation2 + $0x38] sm:$0x1] %vm455, 0.0
    %460 = vst.msk [vmem:[#allocation2 + $0x8] sm:$0xff] %vm122, %v346
    %461 = vst.msk [vmem:[#allocation2 + $0x10] sm:$0xff] %vm122, %v347
    %462 = vst.msk [vmem:[#allocation2 + $0x28] sm:$0xff] %vm122, %v348
    %463 = vst.msk [vmem:[#allocation2 + $0x30] sm:$0xff] %vm122, %v349
    %v464 = vld [vmem:[#allocation2 + $0x7] sm:$0xff]
    %v465 = vld [vmem:[#allocation2 + $0xf] sm:$0xff]
    %v466 = vld [vmem:[#allocation2 + $0x27] sm:$0xff]
    %v467 = vld [vmem:[#allocation2 + $0x2f] sm:$0xff]
    %v468 = vld [vmem:[#allocation10] sm:$0xff]
    %v469 = vld [vmem:[#allocation10 + $0x8] sm:$0xff]
    %v470 = vld [vmem:[#allocation10 + $0x10] sm:$0xff]
    %v471 = vld [vmem:[#allocation10 + $0x18] sm:$0xff]
    %v472 = vld [vmem:[#allocation10 + $0x20] sm:$0xff]
    %v473 = vld [vmem:[#allocation10 + $0x28] sm:$0xff]
    %v474 = vld [vmem:[#allocation10 + $0x30] sm:$0xff]
    %v475 = vld [vmem:[#allocation10 + $0x38] sm:$0xff]
    %v476 = vld [vmem:[#allocation2 + $0x8] sm:$0xff]
    %v477 = vld [vmem:[#allocation2 + $0x10] sm:$0xff]
    %v478 = vld [vmem:[#allocation2 + $0x28] sm:$0xff]
    %v479 = vld [vmem:[#allocation2 + $0x30] sm:$0xff]
    %s480 = scalar_lea.vmem [#allocation10], 64
    %v481 = vld [vmem:[%s480] sm:$0xff]
    %v482 = vld [vmem:[%s480 + $0x8] sm:$0xff]
    %v483 = vld [vmem:[%s480 + $0x10] sm:$0xff]
    %v484 = vld [vmem:[%s480 + $0x18] sm:$0xff]
    %v485 = vld [vmem:[%s480 + $0x20] sm:$0xff]
    %v486 = vld [vmem:[%s480 + $0x28] sm:$0xff]
    %v487 = vld [vmem:[%s480 + $0x30] sm:$0xff]
    %v488 = vld [vmem:[%s480 + $0x38] sm:$0xff]
    %v490 = vsel %vm122, %v476, 0
    %v493 = vsel %vm122, %v477, 0
    %v496 = vsel %vm122, %v478, 0
    %v499 = vsel %vm122, %v479, 0
    %501 = vmatprep.subr.mxu0 0.0
    %502 = vmatpush1.msra.mxu0 %v481
    %503 = vmatprep.subr.mxu0 0.0
    %504 = vmatpush1.msra.mxu0 %v482
    %505 = vmatprep.subr.mxu0 0.0
    %506 = vmatpush1.msra.mxu0 %v483
    %507 = vmatprep.subr.mxu0 0.0
    %508 = vmatpush1.msra.mxu0 %v484
    %509 = vmatprep.subr.mxu0 0.0
    %510 = vmatpush1.msra.mxu0 %v485
    %511 = vmatprep.subr.mxu0 0.0
    %512 = vmatpush1.msra.mxu0 %v486
    %513 = vmatprep.subr.mxu0 0.0
    %514 = vmatpush1.msra.mxu0 %v487
    %515 = vmatprep.subr.mxu0 0.0
    %516 = vmatpush1.msra.mxu0 %v488
    %517 = vmatprep.subr.mxu0 0.0
    %518 = vmatpush1.msra.mxu0 0.0
    %519 = vmatprep.subr.mxu0 0.0
    %520 = vmatpush1.msra.mxu0 0.0
    %521 = vmatprep.subr.mxu0 0.0
    %522 = vmatpush1.msra.mxu0 0.0
    %523 = vmatprep.subr.mxu0 0.0
    %524 = vmatpush1.msra.mxu0 0.0
    %525 = vmatprep.subr.mxu0 0.0
    %526 = vmatpush1.msra.mxu0 0.0
    %527 = vmatprep.subr.mxu0 0.0
    %528 = vmatpush1.msra.mxu0 0.0
    %529 = vmatprep.subr.mxu0 0.0
    %530 = vmatpush1.msra.mxu0 0.0
    %531 = vmatprep.subr.mxu0 0.0
    %532 = vmatpush1.msra.mxu0 0.0
    %533 = vmatprep.subr.mxu0 0.0
    %534 = vmatpush1.msra.mxu0 0.0
    %535 = vmatprep.subr.mxu0 0.0
    %536 = vmatpush1.msra.mxu0 0.0
    %537 = vmatprep.subr.mxu0 0.0
    %538 = vmatpush1.msra.mxu0 0.0
    %539 = vmatprep.subr.mxu0 0.0
    %540 = vmatpush1.msra.mxu0 0.0
    %541 = vmatprep.subr.mxu0 0.0
    %542 = vmatpush1.msra.mxu0 0.0
    %543 = vmatprep.subr.mxu0 0.0
    %544 = vmatpush1.msra.mxu0 0.0
    %545 = vmatprep.subr.mxu0 0.0
    %546 = vmatpush1.msra.mxu0 0.0
    %547 = vmatprep.subr.mxu0 0.0
    %548 = vmatpush1.msra.mxu0 0.0
    %549 = vmatprep.subr.mxu0 0.0
    %550 = vmatpush1.msra.mxu0 0.0
    %551 = vmatprep.subr.mxu0 0.0
    %552 = vmatpush1.msra.mxu0 0.0
    %553 = vmatprep.subr.mxu0 0.0
    %554 = vmatpush1.msra.mxu0 0.0
    %555 = vmatprep.subr.mxu0 0.0
    %556 = vmatpush1.msra.mxu0 0.0
    %557 = vmatprep.subr.mxu0 0.0
    %558 = vmatpush1.msra.mxu0 0.0
    %559 = vmatprep.subr.mxu0 0.0
    %560 = vmatpush1.msra.mxu0 0.0
    %561 = vmatprep.subr.mxu0 0.0
    %562 = vmatpush1.msra.mxu0 0.0
    %563 = vmatprep.subr.mxu0 0.0
    %564 = vmatpush1.msra.mxu0 0.0
    %565 = vmatprep.mubr.f32.mxu0 0.0
    %566 = vmatmul.mubr.f32.gmra.mrb[0].mxu0 %v490
    %v567 = vpop.f32.mrb[0].mxu0
    %v568 = vadd.f32 0.0, %v567
    %v569 = vpop.f32.mrb[0].mxu0
    %570 = vmatprep.mubr.f32.mxu0 0.0
    %571 = vmatmul.mubr.f32.gmra.mrb[0].mxu0 %v493
    %v572 = vpop.f32.mrb[0].mxu0
    %v573 = vadd.f32 0.0, %v572
    %v574 = vpop.f32.mrb[0].mxu0
    %575 = vmatprep.mubr.f32.mxu0 0.0
    %576 = vmatmul.mubr.f32.gmra.mrb[0].mxu0 %v496
    %v577 = vpop.f32.mrb[0].mxu0
    %v578 = vadd.f32 0.0, %v577
    %v579 = vpop.f32.mrb[0].mxu0
    %580 = vmatprep.mubr.f32.mxu0 0.0
    %581 = vmatmul.mubr.f32.gmra.mrb[0].mxu0 %v499
    %v582 = vpop.f32.mrb[0].mxu0
    %v583 = vadd.f32 0.0, %v582
    %v584 = vpop.f32.mrb[0].mxu0
    %585 = vdwg.mxu0
    %v587 = vsel %vm122, %v464, 0
    %v590 = vsel %vm122, %v465, 0
    %v593 = vsel %vm122, %v466, 0
    %v596 = vsel %vm122, %v467, 0
    %598 = vmatprep.subr.mxu0 0.0
    %599 = vmatpush1.msra.mxu0 %v468
    %600 = vmatprep.subr.mxu0 0.0
    %601 = vmatpush1.msra.mxu0 %v469
    %602 = vmatprep.subr.mxu0 0.0
    %603 = vmatpush1.msra.mxu0 %v470
    %604 = vmatprep.subr.mxu0 0.0
    %605 = vmatpush1.msra.mxu0 %v471
    %606 = vmatprep.subr.mxu0 0.0
    %607 = vmatpush1.msra.mxu0 %v472
    %608 = vmatprep.subr.mxu0 0.0
    %609 = vmatpush1.msra.mxu0 %v473
    %610 = vmatprep.subr.mxu0 0.0
    %611 = vmatpush1.msra.mxu0 %v474
    %612 = vmatprep.subr.mxu0 0.0
    %613 = vmatpush1.msra.mxu0 %v475
    %614 = vmatprep.subr.mxu0 0.0
    %615 = vmatpush1.msra.mxu0 0.0
    %616 = vmatprep.subr.mxu0 0.0
    %617 = vmatpush1.msra.mxu0 0.0
    %618 = vmatprep.subr.mxu0 0.0
    %619 = vmatpush1.msra.mxu0 0.0
    %620 = vmatprep.subr.mxu0 0.0
    %621 = vmatpush1.msra.mxu0 0.0
    %622 = vmatprep.subr.mxu0 0.0
    %623 = vmatpush1.msra.mxu0 0.0
    %624 = vmatprep.subr.mxu0 0.0
    %625 = vmatpush1.msra.mxu0 0.0
    %626 = vmatprep.subr.mxu0 0.0
    %627 = vmatpush1.msra.mxu0 0.0
    %628 = vmatprep.subr.mxu0 0.0
    %629 = vmatpush1.msra.mxu0 0.0
    %630 = vmatprep.subr.mxu0 0.0
    %631 = vmatpush1.msra.mxu0 0.0
    %632 = vmatprep.subr.mxu0 0.0
    %633 = vmatpush1.msra.mxu0 0.0
    %634 = vmatprep.subr.mxu0 0.0
    %635 = vmatpush1.msra.mxu0 0.0
    %636 = vmatprep.subr.mxu0 0.0
    %637 = vmatpush1.msra.mxu0 0.0
    %638 = vmatprep.subr.mxu0 0.0
    %639 = vmatpush1.msra.mxu0 0.0
    %640 = vmatprep.subr.mxu0 0.0
    %641 = vmatpush1.msra.mxu0 0.0
    %642 = vmatprep.subr.mxu0 0.0
    %643 = vmatpush1.msra.mxu0 0.0
    %644 = vmatprep.subr.mxu0 0.0
    %645 = vmatpush1.msra.mxu0 0.0
    %646 = vmatprep.subr.mxu0 0.0
    %647 = vmatpush1.msra.mxu0 0.0
    %648 = vmatprep.subr.mxu0 0.0
    %649 = vmatpush1.msra.mxu0 0.0
    %650 = vmatprep.subr.mxu0 0.0
    %651 = vmatpush1.msra.mxu0 0.0
    %652 = vmatprep.subr.mxu0 0.0
    %653 = vmatpush1.msra.mxu0 0.0
    %654 = vmatprep.subr.mxu0 0.0
    %655 = vmatpush1.msra.mxu0 0.0
    %656 = vmatprep.subr.mxu0 0.0
    %657 = vmatpush1.msra.mxu0 0.0
    %658 = vmatprep.subr.mxu0 0.0
    %659 = vmatpush1.msra.mxu0 0.0
    %660 = vmatprep.subr.mxu0 0.0
    %661 = vmatpush1.msra.mxu0 0.0
    %662 = vmatprep.mubr.f32.mxu0 0.0
    %663 = vmatmul.mubr.f32.gmra.mrb[0].mxu0 %v587
    %v664 = vpop.f32.mrb[0].mxu0
    %v665 = vadd.f32 %v568, %v664
    %v666 = vpop.f32.mrb[0].mxu0
    %667 = vmatprep.mubr.f32.mxu0 0.0
    %668 = vmatmul.mubr.f32.gmra.mrb[0].mxu0 %v590
    %v669 = vpop.f32.mrb[0].mxu0
    %v670 = vadd.f32 %v573, %v669
    %v671 = vpop.f32.mrb[0].mxu0
    %672 = vmatprep.mubr.f32.mxu0 0.0
    %673 = vmatmul.mubr.f32.gmra.mrb[0].mxu0 %v593
    %v674 = vpop.f32.mrb[0].mxu0
    %v675 = vadd.f32 %v578, %v674
    %v676 = vpop.f32.mrb[0].mxu0
    %677 = vmatprep.mubr.f32.mxu0 0.0
    %678 = vmatmul.mubr.f32.gmra.mrb[0].mxu0 %v596
    %v679 = vpop.f32.mrb[0].mxu0
    %v680 = vadd.f32 %v583, %v679
    %v681 = vpop.f32.mrb[0].mxu0
    %682 = vdwg.mxu0
    %v683 = vld [vmem:[#allocation2 + $0x9] sm:$0xff]
    %v684 = vld [vmem:[#allocation2 + $0x11] sm:$0xff]
    %v685 = vld [vmem:[#allocation2 + $0x29] sm:$0xff]
    %v686 = vld [vmem:[#allocation2 + $0x31] sm:$0xff]
    %s687 = scalar_lea.vmem [#allocation10], 128
    %v688 = vld [vmem:[%s687] sm:$0xff]
    %v689 = vld [vmem:[%s687 + $0x8] sm:$0xff]
    %v690 = vld [vmem:[%s687 + $0x10] sm:$0xff]
    %v691 = vld [vmem:[%s687 + $0x18] sm:$0xff]
    %v692 = vld [vmem:[%s687 + $0x20] sm:$0xff]
    %v693 = vld [vmem:[%s687 + $0x28] sm:$0xff]
    %v694 = vld [vmem:[%s687 + $0x30] sm:$0xff]
    %v695 = vld [vmem:[%s687 + $0x38] sm:$0xff]
    %v697 = vsel %vm122, %v683, 0
    %v700 = vsel %vm122, %v684, 0
    %v703 = vsel %vm122, %v685, 0
    %v706 = vsel %vm122, %v686, 0
    %708 = vmatprep.subr.mxu0 0.0
    %709 = vmatpush1.msra.mxu0 %v688
    %710 = vmatprep.subr.mxu0 0.0
    %711 = vmatpush1.msra.mxu0 %v689
    %712 = vmatprep.subr.mxu0 0.0
    %713 = vmatpush1.msra.mxu0 %v690
    %714 = vmatprep.subr.mxu0 0.0
    %715 = vmatpush1.msra.mxu0 %v691
    %716 = vmatprep.subr.mxu0 0.0
    %717 = vmatpush1.msra.mxu0 %v692
    %718 = vmatprep.subr.mxu0 0.0
    %719 = vmatpush1.msra.mxu0 %v693
    %720 = vmatprep.subr.mxu0 0.0
    %721 = vmatpush1.msra.mxu0 %v694
    %722 = vmatprep.subr.mxu0 0.0
    %723 = vmatpush1.msra.mxu0 %v695
    %724 = vmatprep.subr.mxu0 0.0
    %725 = vmatpush1.msra.mxu0 0.0
    %726 = vmatprep.subr.mxu0 0.0
    %727 = vmatpush1.msra.mxu0 0.0
    %728 = vmatprep.subr.mxu0 0.0
    %729 = vmatpush1.msra.mxu0 0.0
    %730 = vmatprep.subr.mxu0 0.0
    %731 = vmatpush1.msra.mxu0 0.0
    %732 = vmatprep.subr.mxu0 0.0
    %733 = vmatpush1.msra.mxu0 0.0
    %734 = vmatprep.subr.mxu0 0.0
    %735 = vmatpush1.msra.mxu0 0.0
    %736 = vmatprep.subr.mxu0 0.0
    %737 = vmatpush1.msra.mxu0 0.0
    %738 = vmatprep.subr.mxu0 0.0
    %739 = vmatpush1.msra.mxu0 0.0
    %740 = vmatprep.subr.mxu0 0.0
    %741 = vmatpush1.msra.mxu0 0.0
    %742 = vmatprep.subr.mxu0 0.0
    %743 = vmatpush1.msra.mxu0 0.0
    %744 = vmatprep.subr.mxu0 0.0
    %745 = vmatpush1.msra.mxu0 0.0
    %746 = vmatprep.subr.mxu0 0.0
    %747 = vmatpush1.msra.mxu0 0.0
    %748 = vmatprep.subr.mxu0 0.0
    %749 = vmatpush1.msra.mxu0 0.0
    %750 = vmatprep.subr.mxu0 0.0
    %751 = vmatpush1.msra.mxu0 0.0
    %752 = vmatprep.subr.mxu0 0.0
    %753 = vmatpush1.msra.mxu0 0.0
    %754 = vmatprep.subr.mxu0 0.0
    %755 = vmatpush1.msra.mxu0 0.0
    %756 = vmatprep.subr.mxu0 0.0
    %757 = vmatpush1.msra.mxu0 0.0
    %758 = vmatprep.subr.mxu0 0.0
    %759 = vmatpush1.msra.mxu0 0.0
    %760 = vmatprep.subr.mxu0 0.0
    %761 = vmatpush1.msra.mxu0 0.0
    %762 = vmatprep.subr.mxu0 0.0
    %763 = vmatpush1.msra.mxu0 0.0
    %764 = vmatprep.subr.mxu0 0.0
    %765 = vmatpush1.msra.mxu0 0.0
    %766 = vmatprep.subr.mxu0 0.0
    %767 = vmatpush1.msra.mxu0 0.0
    %768 = vmatprep.subr.mxu0 0.0
    %769 = vmatpush1.msra.mxu0 0.0
    %770 = vmatprep.subr.mxu0 0.0
    %771 = vmatpush1.msra.mxu0 0.0
    %772 = vmatprep.mubr.f32.mxu0 0.0
    %773 = vmatmul.mubr.f32.gmra.mrb[0].mxu0 %v697
    %v774 = vpop.f32.mrb[0].mxu0
    %v775 = vadd.f32 0.0, %v774
    %v776 = vpop.f32.mrb[0].mxu0
    %777 = vmatprep.mubr.f32.mxu0 0.0
    %778 = vmatmul.mubr.f32.gmra.mrb[0].mxu0 %v700
    %v779 = vpop.f32.mrb[0].mxu0
    %v780 = vadd.f32 0.0, %v779
    %v781 = vpop.f32.mrb[0].mxu0
    %782 = vmatprep.mubr.f32.mxu0 0.0
    %783 = vmatmul.mubr.f32.gmra.mrb[0].mxu0 %v703
    %v784 = vpop.f32.mrb[0].mxu0
    %v785 = vadd.f32 0.0, %v784
    %v786 = vpop.f32.mrb[0].mxu0
    %787 = vmatprep.mubr.f32.mxu0 0.0
    %788 = vmatmul.mubr.f32.gmra.mrb[0].mxu0 %v706
    %v789 = vpop.f32.mrb[0].mxu0
    %v790 = vadd.f32 0.0, %v789
    %v791 = vpop.f32.mrb[0].mxu0
    %792 = vdwg.mxu0
    %v793 = vadd.f32 %v665, %v775
    %v794 = vadd.f32 %v670, %v780
    %v795 = vadd.f32 %v675, %v785
    %v796 = vadd.f32 %v680, %v790
    %v797 = vadd.f32 %v793, %v794
    %v798 = vadd.f32 %v797, %v795
    %v799 = vadd.f32 %v798, %v796
    %v800 = vrot.slane %v799, 4
    %v801 = vadd.f32 %v799, %v800
    %v802 = vrot.slane %v801, 2
    %v803 = vadd.f32 %v801, %v802
    %v804 = vrot.slane %v803, 1
    %v805 = vadd.f32 %v803, %v804
    %v806 = vld [vmem:[#allocation12] sm:$0xff]
    %v807 = vld [vmem:[#allocation12 + $0x8] sm:$0xff]
    %v808 = vld [vmem:[#allocation12 + $0x10] sm:$0xff]
    %v809 = vld [vmem:[#allocation12 + $0x18] sm:$0xff]
    %v810 = vld [vmem:[#allocation12 + $0x20] sm:$0xff]
    %v811 = vld [vmem:[#allocation12 + $0x28] sm:$0xff]
    %v812 = vld [vmem:[#allocation12 + $0x30] sm:$0xff]
    %v813 = vld [vmem:[#allocation12 + $0x38] sm:$0xff]
    %v814 = vld [vmem:[#allocation12 + $0x40] sm:$0xff]
    %v815 = vld [vmem:[#allocation12 + $0x48] sm:$0xff]
    %v816 = vld [vmem:[#allocation12 + $0x50] sm:$0xff]
    %v817 = vld [vmem:[#allocation12 + $0x58] sm:$0xff]
    %v818 = vld [vmem:[#allocation12 + $0x60] sm:$0xff]
    %v819 = vld [vmem:[#allocation12 + $0x68] sm:$0xff]
    %v820 = vld [vmem:[#allocation12 + $0x70] sm:$0xff]
    %v821 = vld [vmem:[#allocation12 + $0x78] sm:$0xff]
    %822 = vmatprep.subr.mxu0 0.0
    %823 = vmatpush1.msra.mxu0 %v806
    %824 = vmatprep.subr.mxu0 0.0
    %825 = vmatpush1.msra.mxu0 %v807
    %826 = vmatprep.subr.mxu0 0.0
    %827 = vmatpush1.msra.mxu0 %v808
    %828 = vmatprep.subr.mxu0 0.0
    %829 = vmatpush1.msra.mxu0 %v809
    %830 = vmatprep.subr.mxu0 0.0
    %831 = vmatpush1.msra.mxu0 %v810
    %832 = vmatprep.subr.mxu0 0.0
    %833 = vmatpush1.msra.mxu0 %v811
    %834 = vmatprep.subr.mxu0 0.0
    %835 = vmatpush1.msra.mxu0 %v812
    %836 = vmatprep.subr.mxu0 0.0
    %837 = vmatpush1.msra.mxu0 %v813
    %838 = vmatprep.subr.mxu0 0.0
    %839 = vmatpush1.msra.mxu0 %v814
    %840 = vmatprep.subr.mxu0 0.0
    %841 = vmatpush1.msra.mxu0 %v815
    %842 = vmatprep.subr.mxu0 0.0
    %843 = vmatpush1.msra.mxu0 %v816
    %844 = vmatprep.subr.mxu0 0.0
    %845 = vmatpush1.msra.mxu0 %v817
    %846 = vmatprep.subr.mxu0 0.0
    %847 = vmatpush1.msra.mxu0 %v818
    %848 = vmatprep.subr.mxu0 0.0
    %849 = vmatpush1.msra.mxu0 %v819
    %850 = vmatprep.subr.mxu0 0.0
    %851 = vmatpush1.msra.mxu0 %v820
    %852 = vmatprep.subr.mxu0 0.0
    %853 = vmatpush1.msra.mxu0 %v821
    %854 = vmatprep.subr.mxu0 0.0
    %855 = vmatpush1.msra.mxu0 0.0
    %856 = vmatprep.subr.mxu0 0.0
    %857 = vmatpush1.msra.mxu0 0.0
    %858 = vmatprep.subr.mxu0 0.0
    %859 = vmatpush1.msra.mxu0 0.0
    %860 = vmatprep.subr.mxu0 0.0
    %861 = vmatpush1.msra.mxu0 0.0
    %862 = vmatprep.subr.mxu0 0.0
    %863 = vmatpush1.msra.mxu0 0.0
    %864 = vmatprep.subr.mxu0 0.0
    %865 = vmatpush1.msra.mxu0 0.0
    %866 = vmatprep.subr.mxu0 0.0
    %867 = vmatpush1.msra.mxu0 0.0
    %868 = vmatprep.subr.mxu0 0.0
    %869 = vmatpush1.msra.mxu0 0.0
    %870 = vmatprep.subr.mxu0 0.0
    %871 = vmatpush1.msra.mxu0 0.0
    %872 = vmatprep.subr.mxu0 0.0
    %873 = vmatpush1.msra.mxu0 0.0
    %874 = vmatprep.subr.mxu0 0.0
    %875 = vmatpush1.msra.mxu0 0.0
    %876 = vmatprep.subr.mxu0 0.0
    %877 = vmatpush1.msra.mxu0 0.0
    %878 = vmatprep.subr.mxu0 0.0
    %879 = vmatpush1.msra.mxu0 0.0
    %880 = vmatprep.subr.mxu0 0.0
    %881 = vmatpush1.msra.mxu0 0.0
    %882 = vmatprep.subr.mxu0 0.0
    %883 = vmatpush1.msra.mxu0 0.0
    %884 = vmatprep.subr.mxu0 0.0
    %885 = vmatpush1.msra.mxu0 0.0
    %886 = vmatprep.mubr.f32.mxu0 0.0
    %887 = vmatmul.mubr.f32.gmra.mrb[0].mxu0 %v805
    %v888 = vpop.f32.mrb[0].mxu0
    %v889 = vadd.f32 0.0, %v888
    %v890 = vpop.f32.mrb[0].mxu0
    %891 = vdwg.mxu0
    %v892 = vlaneseq
    %v893 = vshrl.u32 %v892, 7
    %v894 = vsub.s32 0, %v893
    %v895 = vrot.slane %v889, %v894
    %v896 = vsub.f32 %v793, %v895
    %v897 = vsub.f32 %v794, %v895
    %v898 = vsub.f32 %v795, %v895
    %v899 = vsub.f32 %v796, %v895
    %v900 = vmul.f32 %v896, %v896
    %v901 = vmul.f32 %v897, %v897
    %v902 = vmul.f32 %v898, %v898
    %v903 = vmul.f32 %v899, %v899
    %v904 = vadd.f32 %v900, %v901
    %v905 = vadd.f32 %v904, %v902
    %v906 = vadd.f32 %v905, %v903
    %v907 = vrot.slane %v906, 4
    %v908 = vadd.f32 %v906, %v907
    %v909 = vrot.slane %v908, 2
    %v910 = vadd.f32 %v908, %v909
    %v911 = vrot.slane %v910, 1
    %v912 = vadd.f32 %v910, %v911
    %913 = vmatprep.subr.mxu0 0.0
    %914 = vmatpush1.msra.mxu0 %v806
    %915 = vmatprep.subr.mxu0 0.0
    %916 = vmatpush1.msra.mxu0 %v807
    %917 = vmatprep.subr.mxu0 0.0
    %918 = vmatpush1.msra.mxu0 %v808
    %919 = vmatprep.subr.mxu0 0.0
    %920 = vmatpush1.msra.mxu0 %v809
    %921 = vmatprep.subr.mxu0 0.0
    %922 = vmatpush1.msra.mxu0 %v810
    %923 = vmatprep.subr.mxu0 0.0
    %924 = vmatpush1.msra.mxu0 %v811
    %925 = vmatprep.subr.mxu0 0.0
    %926 = vmatpush1.msra.mxu0 %v812
    %927 = vmatprep.subr.mxu0 0.0
    %928 = vmatpush1.msra.mxu0 %v813
    %929 = vmatprep.subr.mxu0 0.0
    %930 = vmatpush1.msra.mxu0 %v814
    %931 = vmatprep.subr.mxu0 0.0
    %932 = vmatpush1.msra.mxu0 %v815
    %933 = vmatprep.subr.mxu0 0.0
    %934 = vmatpush1.msra.mxu0 %v816
    %935 = vmatprep.subr.mxu0 0.0
    %936 = vmatpush1.msra.mxu0 %v817
    %937 = vmatprep.subr.mxu0 0.0
    %938 = vmatpush1.msra.mxu0 %v818
    %939 = vmatprep.subr.mxu0 0.0
    %940 = vmatpush1.msra.mxu0 %v819
    %941 = vmatprep.subr.mxu0 0.0
    %942 = vmatpush1.msra.mxu0 %v820
    %943 = vmatprep.subr.mxu0 0.0
    %944 = vmatpush1.msra.mxu0 %v821
    %945 = vmatprep.subr.mxu0 0.0
    %946 = vmatpush1.msra.mxu0 0.0
    %947 = vmatprep.subr.mxu0 0.0
    %948 = vmatpush1.msra.mxu0 0.0
    %949 = vmatprep.subr.mxu0 0.0
    %950 = vmatpush1.msra.mxu0 0.0
    %951 = vmatprep.subr.mxu0 0.0
    %952 = vmatpush1.msra.mxu0 0.0
    %953 = vmatprep.subr.mxu0 0.0
    %954 = vmatpush1.msra.mxu0 0.0
    %955 = vmatprep.subr.mxu0 0.0
    %956 = vmatpush1.msra.mxu0 0.0
    %957 = vmatprep.subr.mxu0 0.0
    %958 = vmatpush1.msra.mxu0 0.0
    %959 = vmatprep.subr.mxu0 0.0
    %960 = vmatpush1.msra.mxu0 0.0
    %961 = vmatprep.subr.mxu0 0.0
    %962 = vmatpush1.msra.mxu0 0.0
    %963 = vmatprep.subr.mxu0 0.0
    %964 = vmatpush1.msra.mxu0 0.0
    %965 = vmatprep.subr.mxu0 0.0
    %966 = vmatpush1.msra.mxu0 0.0
    %967 = vmatprep.subr.mxu0 0.0
    %968 = vmatpush1.msra.mxu0 0.0
    %969 = vmatprep.subr.mxu0 0.0
    %970 = vmatpush1.msra.mxu0 0.0
    %971 = vmatprep.subr.mxu0 0.0
    %972 = vmatpush1.msra.mxu0 0.0
    %973 = vmatprep.subr.mxu0 0.0
    %974 = vmatpush1.msra.mxu0 0.0
    %975 = vmatprep.subr.mxu0 0.0
    %976 = vmatpush1.msra.mxu0 0.0
    %977 = vmatprep.mubr.f32.mxu0 0.0
    %978 = vmatmul.mubr.f32.gmra.mrb[0].mxu0 %v912
    %v979 = vpop.f32.mrb[0].mxu0
    %v980 = vadd.f32 1e-05, %v979
    %v981 = vpop.f32.mrb[0].mxu0
    %982 = vdwg.mxu0
    %v983 = vrsqrt.pop %v980
    %v984 = vlaneseq
    %v985 = vshrl.u32 %v984, 7
    %v986 = vsub.s32 0, %v985
    %v987 = vrot.slane %v983, %v986
    %v988 = vmul.f32 %v896, %v987
    %v989 = vmul.f32 %v897, %v987
    %v990 = vmul.f32 %v898, %v987
    %v991 = vmul.f32 %v899, %v987
    %v992 = vld [vmem:[%s6] sm:$0x1]
    %v994 = vlaneseq
    %v995 = vshrl.u32 %v994, 7
    %v996 = vsub.s32 0, %v995
    %v997 = vrot.slane %v992, %v996
    %v999 = vmul.f32 %v988, %v997
    %v1000 = vmul.f32 %v989, %v997
    %v1001 = vmul.f32 %v990, %v997
    %v1002 = vmul.f32 %v991, %v997
    %v1003 = vld [vmem:[%s7] sm:$0x1]
    %v1005 = vlaneseq
    %v1006 = vshrl.u32 %v1005, 7
    %v1007 = vsub.s32 0, %v1006
    %v1008 = vrot.slane %v1003, %v1007
    %v1010 = vadd.f32 %v999, %v1008
    %v1011 = vadd.f32 %v1000, %v1008
    %v1012 = vadd.f32 %v1001, %v1008
    %v1013 = vadd.f32 %v1002, %v1008
    %v1014 = vmax.f32 %v1010, 0.0
    %v1015 = vmax.f32 %v1011, 0.0
    %v1016 = vmax.f32 %v1012, 0.0
    %v1017 = vmax.f32 %v1013, 0.0
    %1018 = vst [vmem:[#allocation3 + $0x7] sm:$0x1] 0.0
    %1019 = vst [vmem:[#allocation3 + $0x27] sm:$0x1] 0.0
    %1020 = vst [vmem:[#allocation3 + $0x18] sm:$0x1] 0.0
    %1021 = vst [vmem:[#allocation3 + $0x38] sm:$0x1] 0.0
    %1022 = vst [vmem:[#allocation3 + $0x8] sm:$0xff] %v1014
    %1023 = vst [vmem:[#allocation3 + $0x10] sm:$0xff] %v1015
    %1024 = vst [vmem:[#allocation3 + $0x28] sm:$0xff] %v1016
    %1025 = vst [vmem:[#allocation3 + $0x30] sm:$0xff] %v1017
    %v1026 = vld [vmem:[#allocation3 + $0x7] sm:$0xff]
    %v1027 = vld [vmem:[#allocation3 + $0xf] sm:$0xff]
    %v1028 = vld [vmem:[#allocation3 + $0x27] sm:$0xff]
    %v1029 = vld [vmem:[#allocation3 + $0x2f] sm:$0xff]
    %v1030 = vld [vmem:[#allocation13] sm:$0xff]
    %v1031 = vld [vmem:[#allocation13 + $0x8] sm:$0xff]
    %v1032 = vld [vmem:[#allocation13 + $0x10] sm:$0xff]
    %v1033 = vld [vmem:[#allocation13 + $0x18] sm:$0xff]
    %v1034 = vld [vmem:[#allocation13 + $0x20] sm:$0xff]
    %v1035 = vld [vmem:[#allocation13 + $0x28] sm:$0xff]
    %v1036 = vld [vmem:[#allocation13 + $0x30] sm:$0xff]
    %v1037 = vld [vmem:[#allocation13 + $0x38] sm:$0xff]
    %v1038 = vld [vmem:[#allocation13 + $0x40] sm:$0xff]
    %v1039 = vld [vmem:[#allocation13 + $0x48] sm:$0xff]
    %v1040 = vld [vmem:[#allocation13 + $0x50] sm:$0xff]
    %v1041 = vld [vmem:[#allocation13 + $0x58] sm:$0xff]
    %v1042 = vld [vmem:[#allocation13 + $0x60] sm:$0xff]
    %v1043 = vld [vmem:[#allocation13 + $0x68] sm:$0xff]
    %v1044 = vld [vmem:[#allocation13 + $0x70] sm:$0xff]
    %v1045 = vld [vmem:[#allocation13 + $0x78] sm:$0xff]
    %1046 = vmatprep.subr.mxu0 0.0
    %1047 = vmatpush1.msra.mxu0 %v1030
    %1048 = vmatprep.subr.mxu0 0.0
    %1049 = vmatpush1.msra.mxu0 %v1031
    %1050 = vmatprep.subr.mxu0 0.0
    %1051 = vmatpush1.msra.mxu0 %v1032
    %1052 = vmatprep.subr.mxu0 0.0
    %1053 = vmatpush1.msra.mxu0 %v1033
    %1054 = vmatprep.subr.mxu0 0.0
    %1055 = vmatpush1.msra.mxu0 %v1034
    %1056 = vmatprep.subr.mxu0 0.0
    %1057 = vmatpush1.msra.mxu0 %v1035
    %1058 = vmatprep.subr.mxu0 0.0
    %1059 = vmatpush1.msra.mxu0 %v1036
    %1060 = vmatprep.subr.mxu0 0.0
    %1061 = vmatpush1.msra.mxu0 %v1037
    %1062 = vmatprep.subr.mxu0 0.0
    %1063 = vmatpush1.msra.mxu0 %v1038
    %1064 = vmatprep.subr.mxu0 0.0
    %1065 = vmatpush1.msra.mxu0 %v1039
    %1066 = vmatprep.subr.mxu0 0.0
    %1067 = vmatpush1.msra.mxu0 %v1040
    %1068 = vmatprep.subr.mxu0 0.0
    %1069 = vmatpush1.msra.mxu0 %v1041
    %1070 = vmatprep.subr.mxu0 0.0
    %1071 = vmatpush1.msra.mxu0 %v1042
    %1072 = vmatprep.subr.mxu0 0.0
    %1073 = vmatpush1.msra.mxu0 %v1043
    %1074 = vmatprep.subr.mxu0 0.0
    %1075 = vmatpush1.msra.mxu0 %v1044
    %1076 = vmatprep.subr.mxu0 0.0
    %1077 = vmatpush1.msra.mxu0 %v1045
    %1078 = vmatprep.subr.mxu0 0.0
    %1079 = vmatpush1.msra.mxu0 0.0
    %1080 = vmatprep.subr.mxu0 0.0
    %1081 = vmatpush1.msra.mxu0 0.0
    %1082 = vmatprep.subr.mxu0 0.0
    %1083 = vmatpush1.msra.mxu0 0.0
    %1084 = vmatprep.subr.mxu0 0.0
    %1085 = vmatpush1.msra.mxu0 0.0
    %1086 = vmatprep.subr.mxu0 0.0
    %1087 = vmatpush1.msra.mxu0 0.0
    %1088 = vmatprep.subr.mxu0 0.0
    %1089 = vmatpush1.msra.mxu0 0.0
    %1090 = vmatprep.subr.mxu0 0.0
    %1091 = vmatpush1.msra.mxu0 0.0
    %1092 = vmatprep.subr.mxu0 0.0
    %1093 = vmatpush1.msra.mxu0 0.0
    %1094 = vmatprep.subr.mxu0 0.0
    %1095 = vmatpush1.msra.mxu0 0.0
    %1096 = vmatprep.subr.mxu0 0.0
    %1097 = vmatpush1.msra.mxu0 0.0
    %1098 = vmatprep.subr.mxu0 0.0
    %1099 = vmatpush1.msra.mxu0 0.0
    %1100 = vmatprep.subr.mxu0 0.0
    %1101 = vmatpush1.msra.mxu0 0.0
    %1102 = vmatprep.subr.mxu0 0.0
    %1103 = vmatpush1.msra.mxu0 0.0
    %1104 = vmatprep.subr.mxu0 0.0
    %1105 = vmatpush1.msra.mxu0 0.0
    %1106 = vmatprep.subr.mxu0 0.0
    %1107 = vmatpush1.msra.mxu0 0.0
    %1108 = vmatprep.subr.mxu0 0.0
    %1109 = vmatpush1.msra.mxu0 0.0
    %1110 = vmatprep.mubr.f32.mxu0 0.0
    %1111 = vmatmul.mubr.f32.gmra.mrb[0].mxu0 %v1026
    %v1112 = vpop.f32.mrb[0].mxu0
    %v1113 = vadd.f32 %v437, %v1112
    %v1114 = vpop.f32.mrb[0].mxu0
    %1115 = vmatprep.mubr.f32.mxu0 0.0
    %1116 = vmatmul.mubr.f32.gmra.mrb[0].mxu0 %v1027
    %v1117 = vpop.f32.mrb[0].mxu0
    %v1118 = vadd.f32 %v442, %v1117
    %v1119 = vpop.f32.mrb[0].mxu0
    %1120 = vmatprep.mubr.f32.mxu0 0.0
    %1121 = vmatmul.mubr.f32.gmra.mrb[0].mxu0 %v1028
    %v1122 = vpop.f32.mrb[0].mxu0
    %v1123 = vadd.f32 %v447, %v1122
    %v1124 = vpop.f32.mrb[0].mxu0
    %1125 = vmatprep.mubr.f32.mxu0 0.0
    %1126 = vmatmul.mubr.f32.gmra.mrb[0].mxu0 %v1029
    %v1127 = vpop.f32.mrb[0].mxu0
    %v1128 = vadd.f32 %v452, %v1127
    %v1129 = vpop.f32.mrb[0].mxu0
    %1130 = vdwg.mxu0
    %v1131 = vld [vmem:[#allocation3 + $0x8] sm:$0xff]
    %v1132 = vld [vmem:[#allocation3 + $0x10] sm:$0xff]
    %v1133 = vld [vmem:[#allocation3 + $0x28] sm:$0xff]
    %v1134 = vld [vmem:[#allocation3 + $0x30] sm:$0xff]
    %s1135 = scalar_lea.vmem [#allocation13], 128
    %v1136 = vld [vmem:[%s1135] sm:$0xff]
    %v1137 = vld [vmem:[%s1135 + $0x8] sm:$0xff]
    %v1138 = vld [vmem:[%s1135 + $0x10] sm:$0xff]
    %v1139 = vld [vmem:[%s1135 + $0x18] sm:$0xff]
    %v1140 = vld [vmem:[%s1135 + $0x20] sm:$0xff]
    %v1141 = vld [vmem:[%s1135 + $0x28] sm:$0xff]
    %v1142 = vld [vmem:[%s1135 + $0x30] sm:$0xff]
    %v1143 = vld [vmem:[%s1135 + $0x38] sm:$0xff]
    %v1144 = vld [vmem:[%s1135 + $0x40] sm:$0xff]
    %v1145 = vld [vmem:[%s1135 + $0x48] sm:$0xff]
    %v1146 = vld [vmem:[%s1135 + $0x50] sm:$0xff]
    %v1147 = vld [vmem:[%s1135 + $0x58] sm:$0xff]
    %v1148 = vld [vmem:[%s1135 + $0x60] sm:$0xff]
    %v1149 = vld [vmem:[%s1135 + $0x68] sm:$0xff]
    %v1150 = vld [vmem:[%s1135 + $0x70] sm:$0xff]
    %v1151 = vld [vmem:[%s1135 + $0x78] sm:$0xff]
    %1152 = vmatprep.subr.mxu0 0.0
    %1153 = vmatpush1.msra.mxu0 %v1136
    %1154 = vmatprep.subr.mxu0 0.0
    %1155 = vmatpush1.msra.mxu0 %v1137
    %1156 = vmatprep.subr.mxu0 0.0
    %1157 = vmatpush1.msra.mxu0 %v1138
    %1158 = vmatprep.subr.mxu0 0.0
    %1159 = vmatpush1.msra.mxu0 %v1139
    %1160 = vmatprep.subr.mxu0 0.0
    %1161 = vmatpush1.msra.mxu0 %v1140
    %1162 = vmatprep.subr.mxu0 0.0
    %1163 = vmatpush1.msra.mxu0 %v1141
    %1164 = vmatprep.subr.mxu0 0.0
    %1165 = vmatpush1.msra.mxu0 %v1142
    %1166 = vmatprep.subr.mxu0 0.0
    %1167 = vmatpush1.msra.mxu0 %v1143
    %1168 = vmatprep.subr.mxu0 0.0
    %1169 = vmatpush1.msra.mxu0 %v1144
    %1170 = vmatprep.subr.mxu0 0.0
    %1171 = vmatpush1.msra.mxu0 %v1145
    %1172 = vmatprep.subr.mxu0 0.0
    %1173 = vmatpush1.msra.mxu0 %v1146
    %1174 = vmatprep.subr.mxu0 0.0
    %1175 = vmatpush1.msra.mxu0 %v1147
    %1176 = vmatprep.subr.mxu0 0.0
    %1177 = vmatpush1.msra.mxu0 %v1148
    %1178 = vmatprep.subr.mxu0 0.0
    %1179 = vmatpush1.msra.mxu0 %v1149
    %1180 = vmatprep.subr.mxu0 0.0
    %1181 = vmatpush1.msra.mxu0 %v1150
    %1182 = vmatprep.subr.mxu0 0.0
    %1183 = vmatpush1.msra.mxu0 %v1151
    %1184 = vmatprep.subr.mxu0 0.0
    %1185 = vmatpush1.msra.mxu0 0.0
    %1186 = vmatprep.subr.mxu0 0.0
    %1187 = vmatpush1.msra.mxu0 0.0
    %1188 = vmatprep.subr.mxu0 0.0
    %1189 = vmatpush1.msra.mxu0 0.0
    %1190 = vmatprep.subr.mxu0 0.0
    %1191 = vmatpush1.msra.mxu0 0.0
    %1192 = vmatprep.subr.mxu0 0.0
    %1193 = vmatpush1.msra.mxu0 0.0
    %1194 = vmatprep.subr.mxu0 0.0
    %1195 = vmatpush1.msra.mxu0 0.0
    %1196 = vmatprep.subr.mxu0 0.0
    %1197 = vmatpush1.msra.mxu0 0.0
    %1198 = vmatprep.subr.mxu0 0.0
    %1199 = vmatpush1.msra.mxu0 0.0
    %1200 = vmatprep.subr.mxu0 0.0
    %1201 = vmatpush1.msra.mxu0 0.0
    %1202 = vmatprep.subr.mxu0 0.0
    %1203 = vmatpush1.msra.mxu0 0.0
    %1204 = vmatprep.subr.mxu0 0.0
    %1205 = vmatpush1.msra.mxu0 0.0
    %1206 = vmatprep.subr.mxu0 0.0
    %1207 = vmatpush1.msra.mxu0 0.0
    %1208 = vmatprep.subr.mxu0 0.0
    %1209 = vmatpush1.msra.mxu0 0.0
    %1210 = vmatprep.subr.mxu0 0.0
    %1211 = vmatpush1.msra.mxu0 0.0
    %1212 = vmatprep.subr.mxu0 0.0
    %1213 = vmatpush1.msra.mxu0 0.0
    %1214 = vmatprep.subr.mxu0 0.0
    %1215 = vmatpush1.msra.mxu0 0.0
    %1216 = vmatprep.mubr.f32.mxu0 0.0
    %1217 = vmatmul.mubr.f32.gmra.mrb[0].mxu0 %v1131
    %v1218 = vpop.f32.mrb[0].mxu0
    %v1219 = vadd.f32 0.0, %v1218
    %v1220 = vpop.f32.mrb[0].mxu0
    %1221 = vmatprep.mubr.f32.mxu0 0.0
    %1222 = vmatmul.mubr.f32.gmra.mrb[0].mxu0 %v1132
    %v1223 = vpop.f32.mrb[0].mxu0
    %v1224 = vadd.f32 0.0, %v1223
    %v1225 = vpop.f32.mrb[0].mxu0
    %1226 = vmatprep.mubr.f32.mxu0 0.0
    %1227 = vmatmul.mubr.f32.gmra.mrb[0].mxu0 %v1133
    %v1228 = vpop.f32.mrb[0].mxu0
    %v1229 = vadd.f32 0.0, %v1228
    %v1230 = vpop.f32.mrb[0].mxu0
    %1231 = vmatprep.mubr.f32.mxu0 0.0
    %1232 = vmatmul.mubr.f32.gmra.mrb[0].mxu0 %v1134
    %v1233 = vpop.f32.mrb[0].mxu0
    %v1234 = vadd.f32 0.0, %v1233
    %v1235 = vpop.f32.mrb[0].mxu0
    %1236 = vdwg.mxu0
    %v1237 = vadd.f32 %v1113, %v1219
    %v1238 = vadd.f32 %v1118, %v1224
    %v1239 = vadd.f32 %v1123, %v1229
    %v1240 = vadd.f32 %v1128, %v1234
    %v1241 = vld [vmem:[#allocation3 + $0x9] sm:$0xff]
    %v1242 = vld [vmem:[#allocation3 + $0x11] sm:$0xff]
    %v1243 = vld [vmem:[#allocation3 + $0x29] sm:$0xff]
    %v1244 = vld [vmem:[#allocation3 + $0x31] sm:$0xff]
    %s1245 = scalar_lea.vmem [#allocation13], 256
    %v1246 = vld [vmem:[%s1245] sm:$0xff]
    %v1247 = vld [vmem:[%s1245 + $0x8] sm:$0xff]
    %v1248 = vld [vmem:[%s1245 + $0x10] sm:$0xff]
    %v1249 = vld [vmem:[%s1245 + $0x18] sm:$0xff]
    %v1250 = vld [vmem:[%s1245 + $0x20] sm:$0xff]
    %v1251 = vld [vmem:[%s1245 + $0x28] sm:$0xff]
    %v1252 = vld [vmem:[%s1245 + $0x30] sm:$0xff]
    %v1253 = vld [vmem:[%s1245 + $0x38] sm:$0xff]
    %v1254 = vld [vmem:[%s1245 + $0x40] sm:$0xff]
    %v1255 = vld [vmem:[%s1245 + $0x48] sm:$0xff]
    %v1256 = vld [vmem:[%s1245 + $0x50] sm:$0xff]
    %v1257 = vld [vmem:[%s1245 + $0x58] sm:$0xff]
    %v1258 = vld [vmem:[%s1245 + $0x60] sm:$0xff]
    %v1259 = vld [vmem:[%s1245 + $0x68] sm:$0xff]
    %v1260 = vld [vmem:[%s1245 + $0x70] sm:$0xff]
    %v1261 = vld [vmem:[%s1245 + $0x78] sm:$0xff]
    %1262 = vmatprep.subr.mxu0 0.0
    %1263 = vmatpush1.msra.mxu0 %v1246
    %1264 = vmatprep.subr.mxu0 0.0
    %1265 = vmatpush1.msra.mxu0 %v1247
    %1266 = vmatprep.subr.mxu0 0.0
    %1267 = vmatpush1.msra.mxu0 %v1248
    %1268 = vmatprep.subr.mxu0 0.0
    %1269 = vmatpush1.msra.mxu0 %v1249
    %1270 = vmatprep.subr.mxu0 0.0
    %1271 = vmatpush1.msra.mxu0 %v1250
    %1272 = vmatprep.subr.mxu0 0.0
    %1273 = vmatpush1.msra.mxu0 %v1251
    %1274 = vmatprep.subr.mxu0 0.0
    %1275 = vmatpush1.msra.mxu0 %v1252
    %1276 = vmatprep.subr.mxu0 0.0
    %1277 = vmatpush1.msra.mxu0 %v1253
    %1278 = vmatprep.subr.mxu0 0.0
    %1279 = vmatpush1.msra.mxu0 %v1254
    %1280 = vmatprep.subr.mxu0 0.0
    %1281 = vmatpush1.msra.mxu0 %v1255
    %1282 = vmatprep.subr.mxu0 0.0
    %1283 = vmatpush1.msra.mxu0 %v1256
    %1284 = vmatprep.subr.mxu0 0.0
    %1285 = vmatpush1.msra.mxu0 %v1257
    %1286 = vmatprep.subr.mxu0 0.0
    %1287 = vmatpush1.msra.mxu0 %v1258
    %1288 = vmatprep.subr.mxu0 0.0
    %1289 = vmatpush1.msra.mxu0 %v1259
    %1290 = vmatprep.subr.mxu0 0.0
    %1291 = vmatpush1.msra.mxu0 %v1260
    %1292 = vmatprep.subr.mxu0 0.0
    %1293 = vmatpush1.msra.mxu0 %v1261
    %1294 = vmatprep.subr.mxu0 0.0
    %1295 = vmatpush1.msra.mxu0 0.0
    %1296 = vmatprep.subr.mxu0 0.0
    %1297 = vmatpush1.msra.mxu0 0.0
    %1298 = vmatprep.subr.mxu0 0.0
    %1299 = vmatpush1.msra.mxu0 0.0
    %1300 = vmatprep.subr.mxu0 0.0
    %1301 = vmatpush1.msra.mxu0 0.0
    %1302 = vmatprep.subr.mxu0 0.0
    %1303 = vmatpush1.msra.mxu0 0.0
    %1304 = vmatprep.subr.mxu0 0.0
    %1305 = vmatpush1.msra.mxu0 0.0
    %1306 = vmatprep.subr.mxu0 0.0
    %1307 = vmatpush1.msra.mxu0 0.0
    %1308 = vmatprep.subr.mxu0 0.0
    %1309 = vmatpush1.msra.mxu0 0.0
    %1310 = vmatprep.subr.mxu0 0.0
    %1311 = vmatpush1.msra.mxu0 0.0
    %1312 = vmatprep.subr.mxu0 0.0
    %1313 = vmatpush1.msra.mxu0 0.0
    %1314 = vmatprep.subr.mxu0 0.0
    %1315 = vmatpush1.msra.mxu0 0.0
    %1316 = vmatprep.subr.mxu0 0.0
    %1317 = vmatpush1.msra.mxu0 0.0
    %1318 = vmatprep.subr.mxu0 0.0
    %1319 = vmatpush1.msra.mxu0 0.0
    %1320 = vmatprep.subr.mxu0 0.0
    %1321 = vmatpush1.msra.mxu0 0.0
    %1322 = vmatprep.subr.mxu0 0.0
    %1323 = vmatpush1.msra.mxu0 0.0
    %1324 = vmatprep.subr.mxu0 0.0
    %1325 = vmatpush1.msra.mxu0 0.0
    %1326 = vmatprep.mubr.f32.mxu0 0.0
    %1327 = vmatmul.mubr.f32.gmra.mrb[0].mxu0 %v1241
    %v1328 = vpop.f32.mrb[0].mxu0
    %v1329 = vadd.f32 0.0, %v1328
    %v1330 = vpop.f32.mrb[0].mxu0
    %1331 = vmatprep.mubr.f32.mxu0 0.0
    %1332 = vmatmul.mubr.f32.gmra.mrb[0].mxu0 %v1242
    %v1333 = vpop.f32.mrb[0].mxu0
    %v1334 = vadd.f32 0.0, %v1333
    %v1335 = vpop.f32.mrb[0].mxu0
    %1336 = vmatprep.mubr.f32.mxu0 0.0
    %1337 = vmatmul.mubr.f32.gmra.mrb[0].mxu0 %v1243
    %v1338 = vpop.f32.mrb[0].mxu0
    %v1339 = vadd.f32 0.0, %v1338
    %v1340 = vpop.f32.mrb[0].mxu0
    %1341 = vmatprep.mubr.f32.mxu0 0.0
    %1342 = vmatmul.mubr.f32.gmra.mrb[0].mxu0 %v1244
    %v1343 = vpop.f32.mrb[0].mxu0
    %v1344 = vadd.f32 0.0, %v1343
    %v1345 = vpop.f32.mrb[0].mxu0
    %1346 = vdwg.mxu0
    %v1347 = vadd.f32 %v1237, %v1329
    %v1348 = vadd.f32 %v1238, %v1334
    %v1349 = vadd.f32 %v1239, %v1339
    %v1350 = vadd.f32 %v1240, %v1344
    %1351 = vst [vmem:[#allocation15] sm:$0xff] %v1347
    %1352 = vst [vmem:[#allocation15 + $0x8] sm:$0xff] %v1348
    %1353 = vst [vmem:[#allocation15 + $0x10] sm:$0xff] %v1349
    %1354 = vst [vmem:[#allocation15 + $0x18] sm:$0xff] %v1350
    // Predicated region
    $region66: #{tpu_custom_call.1} parent=1 // pred_check
      _
    $region67: #{tpu_custom_call.1} parent=1 // pred_check_branch
      %1356 = sbr.rel (0) target = $region69
    $region68: #{tpu_custom_call.1} parent=1 // pred_region
      %s1358 = ssub.s32 512, 512
      %1359 = vsyncadd [#allocation6], %s1358
      %s1360 = sshll.u32 [#allocation15], 4
      %s1361 = int_to_ptr.vmem [resolvable:$true] %s1360
      %1366 = dma.vmem_to_hbm [thread:$0]  %s1361, 512, %s10, [#allocation6], 128, 128, 8
    $region69: #{tpu_custom_call.1} parent=1 // pred_fallthru
      _
    // Predicated region
    $region70: #{tpu_custom_call.1} parent=1 // pred_check
      _
    $region71: #{tpu_custom_call.1} parent=1 // pred_check_branch
      %1368 = sbr.rel (0) target = $region73
    $region72: #{tpu_custom_call.1} parent=1 // pred_region
      %1369 = dma.done [#allocation6], 512
    $region73: #{tpu_custom_call.1} parent=1 // pred_fallthru
      _
    %1370 = vsyncpa [#allocation5], 1
    %1371 = vsyncpa [#allocation8], 1
    %1372 = vsyncpa [#allocation11], 1
    %1373 = vsyncpa [#allocation14], 1
    %1374 = vsyncpa [#allocation6], 1

</llo_original>
